<compile_context>
chip_gen: v6e
topology: v6e:2x2x1
jax: 0.10.0
libtpu: 0.0.40
codegen_flags: <defaults>
</compile_context>

<pallas_src>
import functools
import math

import jax
import jax.numpy as jnp
from jax.experimental import pallas as pl
from jax.experimental.pallas import tpu as pltpu


# ----------------------------------------------------------------------------
# Fused kernel: conv1(3x3,s2)+ReLU -> conv2(3x3,s2)+ReLU -> Linear(+scale)+PE
# ----------------------------------------------------------------------------
def _fused_subsample_kernel(xt_ref, w1_ref, b1_ref, w2_ref, b2_ref,
                            w3_ref, b3_ref, pe_ref, o_ref):
    # xt_ref : (9, f2, Tt, 9)  raw-input taps [ (kh2,kw2), j2, i2, (kh1,kw1) ]
    # w1_ref : (9, C)          conv1 weights, rows = (kh1,kw1)
    # w2_ref : (9C, C)         conv2 weights, rows = ((kh2,kw2), ci)
    # w3_ref : (f2*C, C)       linear weights, rows = (j2, co); sqrt(C) folded
    # b*_ref : (1, C) f32      biases (b3 has sqrt(C) folded)
    # pe_ref : (Tt, C) f32     positional-encoding rows of this t2 tile
    # o_ref  : (Tt, C) f32
    _, f2, tt, _ = xt_ref.shape
    cdt = w1_ref.dtype                      # compute dtype (bf16 or f32)

    # ---- conv1 + ReLU : one MXU matmul covering all 9 conv2 tap positions.
    xt = xt_ref[...]                                        # (9, f2, Tt, 9)
    lhs1 = xt.reshape(9 * f2 * tt, 9)                       # leading-dim merge
    a = jnp.dot(lhs1, w1_ref[...], preferred_element_type=jnp.float32)
    a = jnp.maximum(a + b1_ref[...], 0.0).astype(cdt)       # (9*f2*Tt, C)

    # ---- conv2 + ReLU : taps are aligned row slices, im2col happens in VMEM.
    step = f2 * tt
    taps = [a[p * step:(p + 1) * step, :] for p in range(9)]
    p2 = jnp.concatenate(taps, axis=-1)                     # (f2*Tt, 9C)
    z = jnp.dot(p2, w2_ref[...], preferred_element_type=jnp.float32)
    z = jnp.maximum(z + b2_ref[...], 0.0).astype(cdt)       # (f2*Tt, C)

    # ---- output linear (sqrt(C) folded into w3/b3) + positional encoding.
    rows = [z[j * tt:(j + 1) * tt, :] for j in range(f2)]
    lin_in = jnp.concatenate(rows, axis=-1)                 # (Tt, f2*C)
    h = jnp.dot(lin_in, w3_ref[...], preferred_element_type=jnp.float32)
    o_ref[...] = (h + b3_ref[...] + pe_ref[...]).astype(o_ref.dtype)


# ----------------------------------------------------------------------------
# Helpers
# ----------------------------------------------------------------------------
def _cdiv(a, b):
    return -(-a // b)


def _time_tiling(t2, desired_rows):
    """t2 row tile (multiple of 32 so in-kernel reshapes / slices stay
    tile-aligned for f32 and bf16) and tile count.  Prefer >=2 tiles so both
    v7x TensorCores get work even at batch=1."""
    desired = max(32, (int(desired_rows) // 32) * 32)
    if t2 <= 32:
        return 32, 1
    n = max(2, _cdiv(t2, desired))
    tile = max(32, _cdiv(_cdiv(t2, n), 32) * 32)
    return tile, _cdiv(t2, tile)


def _pick_vmem_limit():
    """<= 3/4 of physical VMEM (96 MiB cap): ~96 MiB on v5e/v6e, ~48 on v7x."""
    cap = None
    try:
        cap = getattr(pltpu.get_tpu_info(), "vmem_capacity_bytes", None)
    except Exception:
        cap = None
    if not cap:
        return 48 * 1024 * 1024            # safe on every generation
    return int(min(96 * 1024 * 1024, (3 * cap) // 4))


def make_positional_encoding(max_len, dim, dtype=jnp.float32):
    """OpenNMT sinusoidal table, shape (max_len, dim). dim must be even."""
    assert dim % 2 == 0
    position = jnp.arange(max_len, dtype=jnp.float32)[:, None]
    div_term = jnp.exp(
        jnp.arange(0, dim, 2, dtype=jnp.float32) * -(math.log(10000.0) / dim))
    angles = position * div_term[None, :]
    pe = jnp.zeros((max_len, dim), dtype=jnp.float32)
    pe = pe.at[:, 0::2].set(jnp.sin(angles))
    pe = pe.at[:, 1::2].set(jnp.cos(angles))
    return pe.astype(dtype)


def _build_conv_taps(img, t2p, f2):
    """Tap tensor of the fused (7x7, stride 4) receptive field of the *raw*
    single-channel input, laid out on the conv2 output grid:

       out[b, (kh2,kw2), j2, i2, (kh1,kw1)] =
           img[b, 4*i2 + 2*kh2 + kh1, 4*j2 + 2*kw2 + kw1]

    shape (B, 9, f2, t2p, 9).  This is ~5x the raw input bytes -- negligible
    next to the conv1/conv2 activations, which now never reach HBM."""
    B, T, _ = img.shape
    need_t = 4 * (t2p - 1) + 7
    if T < need_t:
        img = jnp.pad(img, ((0, 0), (0, need_t - T), (0, 0)))
    t_stop = 4 * (t2p - 1) + 1
    f_stop = 4 * (f2 - 1) + 1
    planes = []
    for kh2 in range(3):
        for kw2 in range(3):
            per_u = []
            for kh1 in range(3):
                for kw1 in range(3):
                    dt = 2 * kh2 + kh1
                    df = 2 * kw2 + kw1
                    per_u.append(img[:, dt:dt + t_stop:4, df:df + f_stop:4])
            planes.append(jnp.stack(per_u, axis=-1))        # (B, t2p, f2, 9)
    xt = jnp.stack(planes, axis=1)                          # (B, 9, t2p, f2, 9)
    return jnp.transpose(xt, (0, 1, 3, 2, 4))               # (B, 9, f2, t2p, 9)


# ----------------------------------------------------------------------------
# Pallas wrapper
# ----------------------------------------------------------------------------
@functools.partial(jax.jit, static_argnames=("compute_dtype", "block_rows"))
def conv2d_subsampling_pallas(x, params, *, compute_dtype=jnp.bfloat16,
                              block_rows=128):
    """x: (t, batch, idim) f32 -> (t2, batch, odim) f32."""
    t, batch, idim = x.shape
    W1, b1 = params["conv1_w"], params["conv1_b"]          # (C,1,3,3), (C,)
    W2, b2 = params["conv2_w"], params["conv2_b"]          # (C,C,3,3), (C,)
    W3, b3 = params["out_w"], params["out_b"]              # (C, C*f2), (C,)
    C = W1.shape[0]

    t1, f1 = (t - 1) // 2, (idim - 1) // 2
    t2, f2 = (t1 - 1) // 2, (f1 - 1) // 2
    assert t2 >= 1 and f2 >= 1, "input too small for two stride-2 convs"

    tile, n_t = _time_tiling(t2, block_rows)
    t2p = tile * n_t

    # ---- layout plumbing on the (small) raw input, all in XLA.
    img = jnp.transpose(x, (1, 0, 2))                       # (B, t, idim)
    xtaps = _build_conv_taps(img, t2p, f2).astype(compute_dtype)

    # ---- weights rearranged once so the kernel is three plain matmuls.
    scale = math.sqrt(float(C))
    w1m = W1.reshape(C, 9).T.astype(compute_dtype)                       # (9, C)
    w2m = jnp.transpose(W2, (2, 3, 1, 0)).reshape(9 * C, C).astype(compute_dtype)
    # PyTorch .view feature order is (c outer, f inner); permute W3's input
    # dim to the kernel's (f outer, c inner) order and fold the sqrt(C) scale.
    w3p = W3.reshape(C, C, f2).transpose(0, 2, 1).reshape(C, f2 * C)
    w3m = (w3p * scale).T.astype(compute_dtype)                          # (f2*C, C)
    b1r = b1.reshape(1, C).astype(jnp.float32)
    b2r = b2.reshape(1, C).astype(jnp.float32)
    b3r = (b3 * scale).reshape(1, C).astype(jnp.float32)
    pe = make_positional_encoding(t2p, C)                                # (t2p, C)

    out = pl.pallas_call(
        _fused_subsample_kernel,
        out_shape=jax.ShapeDtypeStruct((batch, t2p, C), jnp.float32),
        grid_spec=pltpu.PrefetchScalarGridSpec(
            num_scalar_prefetch=0,
            grid=(batch, n_t),
            in_specs=[
                # streamed taps: batch squeezed, t2 tiled, everything else full
                pl.BlockSpec((None, 9, f2, tile, 9), lambda b, i: (b, 0, 0, i, 0)),
                # resident weights / biases
                pl.BlockSpec((9, C), lambda b, i: (0, 0)),
                pl.BlockSpec((1, C), lambda b, i: (0, 0)),
                pl.BlockSpec((9 * C, C), lambda b, i: (0, 0)),
                pl.BlockSpec((1, C), lambda b, i: (0, 0)),
                pl.BlockSpec((f2 * C, C), lambda b, i: (0, 0)),
                pl.BlockSpec((1, C), lambda b, i: (0, 0)),
                # PE indexed by the t2-tile only -> reused across the batch axis
                pl.BlockSpec((tile, C), lambda b, i: (i, 0)),
            ],
            out_specs=pl.BlockSpec((None, tile, C), lambda b, i: (b, i, 0)),
        ),
        compiler_params=pltpu.CompilerParams(
            dimension_semantics=("parallel", "parallel"),
            vmem_limit_bytes=_pick_vmem_limit()),
    )(xtaps, w1m, b1r, w2m, b2r, w3m, b3r, pe)

    # Final output is the smallest tensor of the pipeline -> cheap slice+transpose.
    return jnp.transpose(out[:, :t2, :], (1, 0, 2))         # (t2, B, C)


# ----------------------------------------------------------------------------
# Full Conv2dSubsampling forward (mask / lengths handling of the module)
# ----------------------------------------------------------------------------
def conv2d_subsampling_forward(x, params, *, x_mask=None, lengths=None,
                               compute_dtype=jnp.bfloat16, block_rows=128):
    # TODO(synk): training-mode dropout of PositionalEncoding is not modeled;
    #             this is the eval / p=0 identity.
    out = conv2d_subsampling_pallas(
        x, params, compute_dtype=compute_dtype, block_rows=block_rows)
    if x_mask is None:
        return out, None
    sub_mask = x_mask[:, :, :-2:2][:, :, :-2:2]
    # Faithful to the original module, which returns lengths // 4 (even though
    # the conv arithmetic gives floor((floor((L-1)/2)-1)/2)).
    sub_len = lengths // 4 if lengths is not None else None
    return out, sub_mask, sub_len


# ----------------------------------------------------------------------------
# Pure-JAX reference (mirrors the PyTorch module)
# ----------------------------------------------------------------------------
def reference_forward(x, params):
    PREC = jax.lax.Precision.HIGHEST
    W1, b1 = params["conv1_w"], params["conv1_b"]
    W2, b2 = params["conv2_w"], params["conv2_b"]
    W3, b3 = params["out_w"], params["out_b"]
    C = W1.shape[0]

    img = jnp.transpose(x, (1, 0, 2))[:, None, :, :]          # (B,1,t,idim)
    dn = ("NCHW", "OIHW", "NCHW")
    h = jax.lax.conv_general_dilated(img, W1, (2, 2), "VALID",
                                     dimension_numbers=dn, precision=PREC)
    h = jnp.maximum(h + b1[None, :, None, None], 0.0)
    h = jax.lax.conv_general_dilated(h, W2, (2, 2), "VALID",
                                     dimension_numbers=dn, precision=PREC)
    h = jnp.maximum(h + b2[None, :, None, None], 0.0)
    b_, c_, t2, f2 = h.shape
    h = jnp.transpose(h, (2, 0, 1, 3)).reshape(t2, b_, c_ * f2)
    h = jnp.einsum("tbc,dc->tbd", h, W3, precision=PREC) + b3
    pe = make_positional_encoding(t2, C)
    return h * math.sqrt(float(C)) + pe[:, None, :]


# ----------------------------------------------------------------------------
# Demo
# ----------------------------------------------------------------------------
if __name__ == "__main__":
    t, batch, idim, odim = 30, 2, 16, 32
    f_sub = ((idim - 1) // 2 - 1) // 2
    t_sub = ((t - 1) // 2 - 1) // 2

    key = jax.random.PRNGKey(0)
    k = jax.random.split(key, 7)
    x = jax.random.normal(k[0], (t, batch, idim), dtype=jnp.float32)

    def uinit(kk, shape, fan_in):
        bound = 1.0 / math.sqrt(fan_in)
        return jax.random.uniform(kk, shape, jnp.float32, -bound, bound)

    params = {
        "conv1_w": uinit(k[1], (odim, 1, 3, 3), 9),
        "conv1_b": uinit(k[2], (odim,), 9),
        "conv2_w": uinit(k[3], (odim, odim, 3, 3), odim * 9),
        "conv2_b": uinit(k[4], (odim,), odim * 9),
        "out_w":   uinit(k[5], (odim, odim * f_sub), odim * f_sub),
        "out_b":   uinit(k[6], (odim,), odim * f_sub),
    }

    x_mask = jnp.ones((batch, 1, t), dtype=bool)
    lengths = jnp.array([t, t - 4], dtype=jnp.int32)

    # Production configuration: bf16 operand streaming, f32 accumulation.
    out, mask_out, len_out = conv2d_subsampling_forward(
        x, params, x_mask=x_mask, lengths=lengths,
        compute_dtype=jnp.bfloat16)
    out = jax.block_until_ready(out)

    # f32 mode for a tight numerical check of the fused-kernel logic.
    out_f32, _, _ = conv2d_subsampling_forward(
        x, params, x_mask=x_mask, lengths=lengths,
        compute_dtype=jnp.float32)
    out_f32 = jax.block_until_ready(out_f32)

    ref = reference_forward(x, params)

    assert out.shape == (t_sub, batch, odim)
    assert mask_out.shape == (batch, 1, t_sub)
    assert jnp.array_equal(len_out, lengths // 4)
    assert jnp.allclose(out_f32, ref, atol=5e-3, rtol=5e-3), "f32 mismatch"
    rel = jnp.linalg.norm(out - ref) / jnp.linalg.norm(ref)
    assert float(rel) < 3e-2, f"bf16 relative error too large: {float(rel)}"

    print("KERNEL_OK")
</pallas_src>

<mosaic_0001>
module attributes {stable_mosaic.version = 11 : i64} {
  func.func @_fused_subsample_kernel(%arg0: i32, %arg1: i32, %arg2: memref<1x9x3x32x9xbf16, #tpu.memory_space<vmem>>, %arg3: memref<9x32xbf16, #tpu.memory_space<vmem>>, %arg4: memref<1x32xf32, #tpu.memory_space<vmem>>, %arg5: memref<288x32xbf16, #tpu.memory_space<vmem>>, %arg6: memref<1x32xf32, #tpu.memory_space<vmem>>, %arg7: memref<96x32xbf16, #tpu.memory_space<vmem>>, %arg8: memref<1x32xf32, #tpu.memory_space<vmem>>, %arg9: memref<32x32xf32, #tpu.memory_space<vmem>>, %arg10: memref<1x32x32xf32, #tpu.memory_space<vmem>>) attributes {dimension_semantics = [#tpu.dimension_semantics<parallel>, #tpu.dimension_semantics<parallel>], iteration_bounds = array<i64: 2, 1>, scalar_prefetch = 0 : i64, scratch_operands = 0 : i64, tpu.core_type = #tpu.core_type<tc>, window_params = [{transform_indices = @transform_0, window_bounds = array<i64: 1, 9, 3, 32, 9>}, {pipeline_mode = #tpu.pipeline_mode<synchronous>, transform_indices = @transform_1, window_bounds = array<i64: 9, 32>}, {pipeline_mode = #tpu.pipeline_mode<synchronous>, transform_indices = @transform_2, window_bounds = array<i64: 1, 32>}, {pipeline_mode = #tpu.pipeline_mode<synchronous>, transform_indices = @transform_3, window_bounds = array<i64: 288, 32>}, {pipeline_mode = #tpu.pipeline_mode<synchronous>, transform_indices = @transform_4, window_bounds = array<i64: 1, 32>}, {pipeline_mode = #tpu.pipeline_mode<synchronous>, transform_indices = @transform_5, window_bounds = array<i64: 96, 32>}, {pipeline_mode = #tpu.pipeline_mode<synchronous>, transform_indices = @transform_6, window_bounds = array<i64: 1, 32>}, {transform_indices = @transform_7, window_bounds = array<i64: 32, 32>}, {transform_indices = @transform_8, window_bounds = array<i64: 1, 32, 32>}]} {
    %c0 = arith.constant 0 : index
    %c0_0 = arith.constant 0 : index
    %c0_1 = arith.constant 0 : index
    %c0_2 = arith.constant 0 : index
    %c0_3 = arith.constant 0 : index
    %0 = vector.load %arg2[%c0, %c0_0, %c0_1, %c0_2, %c0_3] : memref<1x9x3x32x9xbf16, #tpu.memory_space<vmem>>, vector<1x9x3x32x9xbf16>
    %1 = vector.shape_cast %0 : vector<1x9x3x32x9xbf16> to vector<9x3x32x9xbf16>
    %2 = vector.shape_cast %1 : vector<9x3x32x9xbf16> to vector<864x9xbf16>
    %c0_4 = arith.constant 0 : index
    %c0_5 = arith.constant 0 : index
    %3 = vector.load %arg3[%c0_4, %c0_5] : memref<9x32xbf16, #tpu.memory_space<vmem>>, vector<9x32xbf16>
    %cst = arith.constant dense<0.000000e+00> : vector<864x32xf32>
    %4 = tpu.matmul %2, %3, %cst {dimension_numbers = #tpu.dot_dimension_numbers<[1], [0], [0], [1], [0, 0, 1, 1], [], []>} : vector<864x9xbf16>, vector<9x32xbf16>, vector<864x32xf32> -> vector<864x32xf32>
    %c0_6 = arith.constant 0 : index
    %c0_7 = arith.constant 0 : index
    %5 = vector.load %arg4[%c0_6, %c0_7] : memref<1x32xf32, #tpu.memory_space<vmem>>, vector<1x32xf32>
    %6 = vector.broadcast %5 : vector<1x32xf32> to vector<864x32xf32>
    %7 = arith.addf %4, %6 : vector<864x32xf32>
    %cst_8 = arith.constant 0.000000e+00 : f32
    %8 = vector.broadcast %cst_8 : f32 to vector<864x32xf32>
    %9 = arith.maximumf %7, %8 : vector<864x32xf32>
    %10 = arith.truncf %9 : vector<864x32xf32> to vector<864x32xbf16>
    %11 = vector.extract_strided_slice %10 {offsets = [0, 0], sizes = [96, 32], strides = [1, 1]} : vector<864x32xbf16> to vector<96x32xbf16>
    %12 = vector.extract_strided_slice %10 {offsets = [96, 0], sizes = [96, 32], strides = [1, 1]} : vector<864x32xbf16> to vector<96x32xbf16>
    %13 = vector.extract_strided_slice %10 {offsets = [192, 0], sizes = [96, 32], strides = [1, 1]} : vector<864x32xbf16> to vector<96x32xbf16>
    %14 = vector.extract_strided_slice %10 {offsets = [288, 0], sizes = [96, 32], strides = [1, 1]} : vector<864x32xbf16> to vector<96x32xbf16>
    %15 = vector.extract_strided_slice %10 {offsets = [384, 0], sizes = [96, 32], strides = [1, 1]} : vector<864x32xbf16> to vector<96x32xbf16>
    %16 = vector.extract_strided_slice %10 {offsets = [480, 0], sizes = [96, 32], strides = [1, 1]} : vector<864x32xbf16> to vector<96x32xbf16>
    %17 = vector.extract_strided_slice %10 {offsets = [576, 0], sizes = [96, 32], strides = [1, 1]} : vector<864x32xbf16> to vector<96x32xbf16>
    %18 = vector.extract_strided_slice %10 {offsets = [672, 0], sizes = [96, 32], strides = [1, 1]} : vector<864x32xbf16> to vector<96x32xbf16>
    %19 = vector.extract_strided_slice %10 {offsets = [768, 0], sizes = [96, 32], strides = [1, 1]} : vector<864x32xbf16> to vector<96x32xbf16>
    %20 = tpu.concatenate %11, %12, %13, %14, %15, %16, %17, %18, %19 in 1 : vector<96x32xbf16>, vector<96x32xbf16>, vector<96x32xbf16>, vector<96x32xbf16>, vector<96x32xbf16>, vector<96x32xbf16>, vector<96x32xbf16>, vector<96x32xbf16>, vector<96x32xbf16> -> vector<96x288xbf16>
    %c0_9 = arith.constant 0 : index
    %c0_10 = arith.constant 0 : index
    %21 = vector.load %arg5[%c0_9, %c0_10] : memref<288x32xbf16, #tpu.memory_space<vmem>>, vector<288x32xbf16>
    %cst_11 = arith.constant dense<0.000000e+00> : vector<96x32xf32>
    %22 = tpu.matmul %20, %21, %cst_11 {dimension_numbers = #tpu.dot_dimension_numbers<[1], [0], [0], [1], [0, 0, 1, 1], [], []>} : vector<96x288xbf16>, vector<288x32xbf16>, vector<96x32xf32> -> vector<96x32xf32>
    %c0_12 = arith.constant 0 : index
    %c0_13 = arith.constant 0 : index
    %23 = vector.load %arg6[%c0_12, %c0_13] : memref<1x32xf32, #tpu.memory_space<vmem>>, vector<1x32xf32>
    %24 = vector.broadcast %23 : vector<1x32xf32> to vector<96x32xf32>
    %25 = arith.addf %22, %24 : vector<96x32xf32>
    %cst_14 = arith.constant 0.000000e+00 : f32
    %26 = vector.broadcast %cst_14 : f32 to vector<96x32xf32>
    %27 = arith.maximumf %25, %26 : vector<96x32xf32>
    %28 = arith.truncf %27 : vector<96x32xf32> to vector<96x32xbf16>
    %29 = vector.extract_strided_slice %28 {offsets = [0, 0], sizes = [32, 32], strides = [1, 1]} : vector<96x32xbf16> to vector<32x32xbf16>
    %30 = vector.extract_strided_slice %28 {offsets = [32, 0], sizes = [32, 32], strides = [1, 1]} : vector<96x32xbf16> to vector<32x32xbf16>
    %31 = vector.extract_strided_slice %28 {offsets = [64, 0], sizes = [32, 32], strides = [1, 1]} : vector<96x32xbf16> to vector<32x32xbf16>
    %32 = tpu.concatenate %29, %30, %31 in 1 : vector<32x32xbf16>, vector<32x32xbf16>, vector<32x32xbf16> -> vector<32x96xbf16>
    %c0_15 = arith.constant 0 : index
    %c0_16 = arith.constant 0 : index
    %33 = vector.load %arg7[%c0_15, %c0_16] : memref<96x32xbf16, #tpu.memory_space<vmem>>, vector<96x32xbf16>
    %cst_17 = arith.constant dense<0.000000e+00> : vector<32x32xf32>
    %34 = tpu.matmul %32, %33, %cst_17 {dimension_numbers = #tpu.dot_dimension_numbers<[1], [0], [0], [1], [0, 0, 1, 1], [], []>} : vector<32x96xbf16>, vector<96x32xbf16>, vector<32x32xf32> -> vector<32x32xf32>
    %c0_18 = arith.constant 0 : index
    %c0_19 = arith.constant 0 : index
    %35 = vector.load %arg8[%c0_18, %c0_19] : memref<1x32xf32, #tpu.memory_space<vmem>>, vector<1x32xf32>
    %36 = vector.broadcast %35 : vector<1x32xf32> to vector<32x32xf32>
    %37 = arith.addf %34, %36 : vector<32x32xf32>
    %c0_20 = arith.constant 0 : index
    %c0_21 = arith.constant 0 : index
    %38 = vector.load %arg9[%c0_20, %c0_21] : memref<32x32xf32, #tpu.memory_space<vmem>>, vector<32x32xf32>
    %39 = arith.addf %37, %38 : vector<32x32xf32>
    %c0_22 = arith.constant 0 : index
    %c0_23 = arith.constant 0 : index
    %c0_24 = arith.constant 0 : index
    %40 = vector.load %arg10[%c0_22, %c0_23, %c0_24] : memref<1x32x32xf32, #tpu.memory_space<vmem>>, vector<1x32x32xf32>
    %41 = vector.shape_cast %40 : vector<1x32x32xf32> to vector<32x32xf32>
    %42 = vector.shape_cast %39 : vector<32x32xf32> to vector<1x32x32xf32>
    tpu.vector_store %arg10[%c0_22, %c0_23, %c0_24], %42 {strides = array<i32>} : memref<1x32x32xf32, #tpu.memory_space<vmem>>, vector<1x32x32xf32>,
    return
  }
  func.func @transform_0(%arg0: i32, %arg1: i32) -> (i32, i32, i32, i32, i32) {
    %c0_i32 = arith.constant 0 : i32
    %c0_i32_0 = arith.constant 0 : i32
    %c0_i32_1 = arith.constant 0 : i32
    %c0_i32_2 = arith.constant 0 : i32
    return %arg0, %c0_i32, %c0_i32_0, %arg1, %c0_i32_1 : i32, i32, i32, i32, i32
  }
  func.func @transform_1(%arg0: i32, %arg1: i32) -> (i32, i32) {
    %c0_i32 = arith.constant 0 : i32
    %c0_i32_0 = arith.constant 0 : i32
    %c0_i32_1 = arith.constant 0 : i32
    return %c0_i32, %c0_i32_0 : i32, i32
  }
  func.func @transform_2(%arg0: i32, %arg1: i32) -> (i32, i32) {
    %c0_i32 = arith.constant 0 : i32
    %c0_i32_0 = arith.constant 0 : i32
    %c0_i32_1 = arith.constant 0 : i32
    return %c0_i32, %c0_i32_0 : i32, i32
  }
  func.func @transform_3(%arg0: i32, %arg1: i32) -> (i32, i32) {
    %c0_i32 = arith.constant 0 : i32
    %c0_i32_0 = arith.constant 0 : i32
    %c0_i32_1 = arith.constant 0 : i32
    return %c0_i32, %c0_i32_0 : i32, i32
  }
  func.func @transform_4(%arg0: i32, %arg1: i32) -> (i32, i32) {
    %c0_i32 = arith.constant 0 : i32
    %c0_i32_0 = arith.constant 0 : i32
    %c0_i32_1 = arith.constant 0 : i32
    return %c0_i32, %c0_i32_0 : i32, i32
  }
  func.func @transform_5(%arg0: i32, %arg1: i32) -> (i32, i32) {
    %c0_i32 = arith.constant 0 : i32
    %c0_i32_0 = arith.constant 0 : i32
    %c0_i32_1 = arith.constant 0 : i32
    return %c0_i32, %c0_i32_0 : i32, i32
  }
  func.func @transform_6(%arg0: i32, %arg1: i32) -> (i32, i32) {
    %c0_i32 = arith.constant 0 : i32
    %c0_i32_0 = arith.constant 0 : i32
    %c0_i32_1 = arith.constant 0 : i32
    return %c0_i32, %c0_i32_0 : i32, i32
  }
  func.func @transform_7(%arg0: i32, %arg1: i32) -> (i32, i32) {
    %c0_i32 = arith.constant 0 : i32
    %c0_i32_0 = arith.constant 0 : i32
    return %arg1, %c0_i32 : i32, i32
  }
  func.func @transform_8(%arg0: i32, %arg1: i32) -> (i32, i32, i32) {
    %c0_i32 = arith.constant 0 : i32
    %c0_i32_0 = arith.constant 0 : i32
    return %arg0, %arg1, %c0_i32 : i32, i32, i32
  }
}

</mosaic_0001>

<llo_original>
// kernel: conv2d_subsampling_pallas.1
$region0: #{conv2d_subsampling_pallas.1}
  #allocation0 [shape = 'u32[]', space=smem, size = 0x4, offset = 0x4, fixed_abs, tag = 'smem constant byte address 0x4 - core index']
  #allocation1 [shape = 'u32[144,128]{1,0:T(1,128)}', space=vmem, size = 0x12000, scoped, tag = 'internal scratch']
  %s0 = inlined_call_operand.vmem [shape: bf16[2,9,3,32,9], index: 0, kind: input, shape index: {}]
  %s1 = inlined_call_operand.vmem [shape: bf16[9,32], index: 1, kind: input, shape index: {}]
  %s2 = inlined_call_operand.vmem [shape: f32[1,32], index: 2, kind: input, shape index: {}]
  %s3 = inlined_call_operand.vmem [shape: bf16[288,32], index: 3, kind: input, shape index: {}]
  %s4 = inlined_call_operand.vmem [shape: f32[1,32], index: 4, kind: input, shape index: {}]
  %s5 = inlined_call_operand.vmem [shape: bf16[96,32], index: 5, kind: input, shape index: {}]
  %s6 = inlined_call_operand.vmem [shape: f32[1,32], index: 6, kind: input, shape index: {}]
  %s7 = inlined_call_operand.vmem [shape: f32[32,32], index: 7, kind: input, shape index: {}]
  %s8 = inlined_call_operand.vmem [shape: f32[2,32,32], index: 8, kind: output, shape index: {}]
  %s9 = sld [smem:[#allocation0]]
  $region65: #{conv2d_subsampling_pallas.1} parent=0
    _
  %s11 = ssub.s32 1, %s9
  %s12 = scalar_select 0, %s11, %s9
  loop: start=0, step=1, limit=4
  $region2: #{conv2d_subsampling_pallas.1} parent=0 // loop_pre_header
    _
  $region3: #{conv2d_subsampling_pallas.1} parent=0 // loop_header
    %s14 = sphi 0, %s18
    %p15 = scmp.ge.s32.totalorder %s14, 4
    %s21 = sphi 0, %s33
    %s22 = sphi 0, %s29
    %s23 = sphi 0, %s21
    %s24 = sphi 0, %s22
    %s25 = sphi 0, %s23
    %s26 = sphi 0, %s24
    %s38 = sphi 0, %s40
    %s41 = sphi 0, %s38
    %s42 = sphi 0, %s41
    %s58 = sphi 0, %s42
    %s62 = sphi 0, %s62
    %s64 = sphi 0, %s62
    %s65 = sphi 0, %s64
    %s79 = sphi 0, %s65
    %s83 = sphi 0, %s83
    %s85 = sphi 0, %s83
    %s86 = sphi 0, %s85
    %s100 = sphi 0, %s86
    %s104 = sphi 0, %s104
    %s106 = sphi 0, %s104
    %s107 = sphi 0, %s106
    %s121 = sphi 0, %s107
    %s125 = sphi 0, %s125
    %s127 = sphi 0, %s125
    %s128 = sphi 0, %s127
    %s142 = sphi 0, %s128
    %s146 = sphi 0, %s146
    %s148 = sphi 0, %s146
    %s149 = sphi 0, %s148
    %s163 = sphi 0, %s149
    %s167 = sphi 0, %s167
    %s169 = sphi 0, %s167
    %s170 = sphi 0, %s169
    %s184 = sphi 0, %s170
    %s190 = sphi 0, %s192
    %s193 = sphi 0, %s190
    %s194 = sphi 0, %s193
    %s210 = sphi 0, %s194
    %s218 = sphi 0, %s220
    %s221 = sphi 0, %s218
    %s222 = sphi 0, %s221
    %s238 = sphi 0, %s222
  $region4: #{conv2d_subsampling_pallas.1} parent=0 // loop_header_branch
    %17 = sbr.rel (%p15) target = $region8
  $region5: #{conv2d_subsampling_pallas.1} parent=0 // loop_body
    %s19 = ssub.s32 %s14, 1
    %s20 = ssub.s32 %s14, 2
    %s27 = sadd.s32 1, %s22
    %p28 = scmp.ge.s32.totalorder %s27, 1
    %s29 = scalar_select %p28, 0, %s27
    %s30 = sadd.s32 1, %s21
    %s31 = scalar_select %p28, %s30, %s21
    %p32 = scmp.ge.s32.totalorder %s31, 2
    %s33 = scalar_select %p32, 0, %s31
    %s34 = ssub.s32 %s21, %s33
    %s35 = ssub.s32 %s22, %s29
    %s36 = sor.u32 %s34, %s35
    %p37 = scmp.eq.s32.totalorder %s36, 0
    %s39 = sadd.s32 %s38, 1
    %s40 = scalar_select %p37, %s38, %s39
    %p43 = pneg %p37
    %p44 = scmp.eq.s32.totalorder %s14, 1
    %p45 = por %p43, %p44
    %p46 = scmp.ne.s32.totalorder %s38, %s41
    %p47 = scmp.eq.s32.totalorder %s14, 0
    %p48 = por %p46, %p47
    %p49 = scmp.ne.s32.totalorder %s38, %s41
    %p50 = scmp.eq.s32.totalorder %s19, 1
    %p51 = por %p49, %p50
    %p52 = scmp.ne.s32.totalorder %s41, %s42
    %p53 = scmp.eq.s32.totalorder %s19, 0
    %p54 = por %p52, %p53
    %p55 = scmp.ne.s32.totalorder %s41, %s42
    %p56 = scmp.eq.s32.totalorder %s20, 1
    %p57 = por %p55, %p56
    %p59 = scmp.ne.s32.totalorder %s42, %s58
    %p60 = scmp.eq.s32.totalorder %s20, 0
    %p61 = por %p59, %p60
    %s63 = sadd.s32 %s62, 1
    %p66 = scmp.eq.s32.totalorder %s14, 1
    %p67 = scmp.ne.s32.totalorder %s62, %s64
    %p68 = scmp.eq.s32.totalorder %s14, 0
    %p69 = por %p67, %p68
    %p70 = scmp.ne.s32.totalorder %s62, %s64
    %p71 = scmp.eq.s32.totalorder %s19, 1
    %p72 = por %p70, %p71
    %p73 = scmp.ne.s32.totalorder %s64, %s65
    %p74 = scmp.eq.s32.totalorder %s19, 0
    %p75 = por %p73, %p74
    %p76 = scmp.ne.s32.totalorder %s64, %s65
    %p77 = scmp.eq.s32.totalorder %s20, 1
    %p78 = por %p76, %p77
    %p80 = scmp.ne.s32.totalorder %s65, %s79
    %p81 = scmp.eq.s32.totalorder %s20, 0
    %p82 = por %p80, %p81
    %s84 = sadd.s32 %s83, 1
    %p87 = scmp.eq.s32.totalorder %s14, 1
    %p88 = scmp.ne.s32.totalorder %s83, %s85
    %p89 = scmp.eq.s32.totalorder %s14, 0
    %p90 = por %p88, %p89
    %p91 = scmp.ne.s32.totalorder %s83, %s85
    %p92 = scmp.eq.s32.totalorder %s19, 1
    %p93 = por %p91, %p92
    %p94 = scmp.ne.s32.totalorder %s85, %s86
    %p95 = scmp.eq.s32.totalorder %s19, 0
    %p96 = por %p94, %p95
    %p97 = scmp.ne.s32.totalorder %s85, %s86
    %p98 = scmp.eq.s32.totalorder %s20, 1
    %p99 = por %p97, %p98
    %p101 = scmp.ne.s32.totalorder %s86, %s100
    %p102 = scmp.eq.s32.totalorder %s20, 0
    %p103 = por %p101, %p102
    %s105 = sadd.s32 %s104, 1
    %p108 = scmp.eq.s32.totalorder %s14, 1
    %p109 = scmp.ne.s32.totalorder %s104, %s106
    %p110 = scmp.eq.s32.totalorder %s14, 0
    %p111 = por %p109, %p110
    %p112 = scmp.ne.s32.totalorder %s104, %s106
    %p113 = scmp.eq.s32.totalorder %s19, 1
    %p114 = por %p112, %p113
    %p115 = scmp.ne.s32.totalorder %s106, %s107
    %p116 = scmp.eq.s32.totalorder %s19, 0
    %p117 = por %p115, %p116
    %p118 = scmp.ne.s32.totalorder %s106, %s107
    %p119 = scmp.eq.s32.totalorder %s20, 1
    %p120 = por %p118, %p119
    %p122 = scmp.ne.s32.totalorder %s107, %s121
    %p123 = scmp.eq.s32.totalorder %s20, 0
    %p124 = por %p122, %p123
    %s126 = sadd.s32 %s125, 1
    %p129 = scmp.eq.s32.totalorder %s14, 1
    %p130 = scmp.ne.s32.totalorder %s125, %s127
    %p131 = scmp.eq.s32.totalorder %s14, 0
    %p132 = por %p130, %p131
    %p133 = scmp.ne.s32.totalorder %s125, %s127
    %p134 = scmp.eq.s32.totalorder %s19, 1
    %p135 = por %p133, %p134
    %p136 = scmp.ne.s32.totalorder %s127, %s128
    %p137 = scmp.eq.s32.totalorder %s19, 0
    %p138 = por %p136, %p137
    %p139 = scmp.ne.s32.totalorder %s127, %s128
    %p140 = scmp.eq.s32.totalorder %s20, 1
    %p141 = por %p139, %p140
    %p143 = scmp.ne.s32.totalorder %s128, %s142
    %p144 = scmp.eq.s32.totalorder %s20, 0
    %p145 = por %p143, %p144
    %s147 = sadd.s32 %s146, 1
    %p150 = scmp.eq.s32.totalorder %s14, 1
    %p151 = scmp.ne.s32.totalorder %s146, %s148
    %p152 = scmp.eq.s32.totalorder %s14, 0
    %p153 = por %p151, %p152
    %p154 = scmp.ne.s32.totalorder %s146, %s148
    %p155 = scmp.eq.s32.totalorder %s19, 1
    %p156 = por %p154, %p155
    %p157 = scmp.ne.s32.totalorder %s148, %s149
    %p158 = scmp.eq.s32.totalorder %s19, 0
    %p159 = por %p157, %p158
    %p160 = scmp.ne.s32.totalorder %s148, %s149
    %p161 = scmp.eq.s32.totalorder %s20, 1
    %p162 = por %p160, %p161
    %p164 = scmp.ne.s32.totalorder %s149, %s163
    %p165 = scmp.eq.s32.totalorder %s20, 0
    %p166 = por %p164, %p165
    %s168 = sadd.s32 %s167, 1
    %p171 = scmp.eq.s32.totalorder %s14, 1
    %p172 = scmp.ne.s32.totalorder %s167, %s169
    %p173 = scmp.eq.s32.totalorder %s14, 0
    %p174 = por %p172, %p173
    %p175 = scmp.ne.s32.totalorder %s167, %s169
    %p176 = scmp.eq.s32.totalorder %s19, 1
    %p177 = por %p175, %p176
    %p178 = scmp.ne.s32.totalorder %s169, %s170
    %p179 = scmp.eq.s32.totalorder %s19, 0
    %p180 = por %p178, %p179
    %p181 = scmp.ne.s32.totalorder %s169, %s170
    %p182 = scmp.eq.s32.totalorder %s20, 1
    %p183 = por %p181, %p182
    %p185 = scmp.ne.s32.totalorder %s170, %s184
    %p186 = scmp.eq.s32.totalorder %s20, 0
    %p187 = por %p185, %p186
    %s188 = ssub.s32 %s22, %s29
    %p189 = scmp.eq.s32.totalorder %s188, 0
    %s191 = sadd.s32 %s190, 1
    %s192 = scalar_select %p189, %s190, %s191
    %p195 = pneg %p189
    %p196 = scmp.eq.s32.totalorder %s14, 1
    %p197 = por %p195, %p196
    %p198 = scmp.ne.s32.totalorder %s190, %s193
    %p199 = scmp.eq.s32.totalorder %s14, 0
    %p200 = por %p198, %p199
    %p201 = scmp.ne.s32.totalorder %s190, %s193
    %p202 = scmp.eq.s32.totalorder %s19, 1
    %p203 = por %p201, %p202
    %p204 = scmp.ne.s32.totalorder %s193, %s194
    %p205 = scmp.eq.s32.totalorder %s19, 0
    %p206 = por %p204, %p205
    %p207 = scmp.ne.s32.totalorder %s193, %s194
    %p208 = scmp.eq.s32.totalorder %s20, 1
    %p209 = por %p207, %p208
    %p211 = scmp.ne.s32.totalorder %s194, %s210
    %p212 = scmp.eq.s32.totalorder %s20, 0
    %p213 = por %p211, %p212
    %s214 = ssub.s32 %s21, %s33
    %s215 = ssub.s32 %s22, %s29
    %s216 = sor.u32 %s214, %s215
    %p217 = scmp.eq.s32.totalorder %s216, 0
    %s219 = sadd.s32 %s218, 1
    %s220 = scalar_select %p217, %s218, %s219
    %p223 = pneg %p217
    %p224 = scmp.eq.s32.totalorder %s14, 1
    %p225 = por %p223, %p224
    %p226 = scmp.ne.s32.totalorder %s218, %s221
    %p227 = scmp.eq.s32.totalorder %s14, 0
    %p228 = por %p226, %p227
    %p229 = scmp.ne.s32.totalorder %s218, %s221
    %p230 = scmp.eq.s32.totalorder %s19, 1
    %p231 = por %p229, %p230
    %p232 = scmp.ne.s32.totalorder %s221, %s222
    %p233 = scmp.eq.s32.totalorder %s19, 0
    %p234 = por %p232, %p233
    %p235 = scmp.ne.s32.totalorder %s221, %s222
    %p236 = scmp.eq.s32.totalorder %s20, 1
    %p237 = por %p235, %p236
    %p239 = scmp.ne.s32.totalorder %s222, %s238
    %p240 = scmp.eq.s32.totalorder %s20, 0
    %p241 = por %p239, %p240
    %p242 = scmp.le.s32.totalorder 1, %s14
    %p243 = scmp.lt.s32.totalorder %s14, 3
    %p244 = pnand %p242, %p243
    %p245 = pneg %p244
    // Predicated region
    $region9: #{conv2d_subsampling_pallas.1} parent=5 // pred_check
      _
    $region10: #{conv2d_subsampling_pallas.1} parent=5 // pred_check_branch
      %247 = sbr.rel (%p244) target = $region12
    $region11: #{conv2d_subsampling_pallas.1} parent=5 // pred_region
      %s248 = ssub.s32 %s14, 1
      // Predicated region
      $region13: #{conv2d_subsampling_pallas.1} parent=11 // pred_check
        %p249 = pneg %p75
      $region14: #{conv2d_subsampling_pallas.1} parent=11 // pred_check_branch
        %251 = sbr.rel (%p249) target = $region16
      $region15: #{conv2d_subsampling_pallas.1} parent=11 // pred_region
        _
      $region16: #{conv2d_subsampling_pallas.1} parent=11 // pred_fallthru
        _
      // Predicated region
      $region17: #{conv2d_subsampling_pallas.1} parent=11 // pred_check
        %p252 = pneg %p96
      $region18: #{conv2d_subsampling_pallas.1} parent=11 // pred_check_branch
        %254 = sbr.rel (%p252) target = $region20
      $region19: #{conv2d_subsampling_pallas.1} parent=11 // pred_region
        _
      $region20: #{conv2d_subsampling_pallas.1} parent=11 // pred_fallthru
        _
      // Predicated region
      $region21: #{conv2d_subsampling_pallas.1} parent=11 // pred_check
        %p255 = pneg %p117
      $region22: #{conv2d_subsampling_pallas.1} parent=11 // pred_check_branch
        %257 = sbr.rel (%p255) target = $region24
      $region23: #{conv2d_subsampling_pallas.1} parent=11 // pred_region
        _
      $region24: #{conv2d_subsampling_pallas.1} parent=11 // pred_fallthru
        _
      // Predicated region
      $region25: #{conv2d_subsampling_pallas.1} parent=11 // pred_check
        %p258 = pneg %p138
      $region26: #{conv2d_subsampling_pallas.1} parent=11 // pred_check_branch
        %260 = sbr.rel (%p258) target = $region28
      $region27: #{conv2d_subsampling_pallas.1} parent=11 // pred_region
        _
      $region28: #{conv2d_subsampling_pallas.1} parent=11 // pred_fallthru
        _
      // Predicated region
      $region29: #{conv2d_subsampling_pallas.1} parent=11 // pred_check
        %p261 = pneg %p159
      $region30: #{conv2d_subsampling_pallas.1} parent=11 // pred_check_branch
        %263 = sbr.rel (%p261) target = $region32
      $region31: #{conv2d_subsampling_pallas.1} parent=11 // pred_region
        _
      $region32: #{conv2d_subsampling_pallas.1} parent=11 // pred_fallthru
        _
      // Predicated region
      $region33: #{conv2d_subsampling_pallas.1} parent=11 // pred_check
        %p264 = pneg %p180
      $region34: #{conv2d_subsampling_pallas.1} parent=11 // pred_check_branch
        %266 = sbr.rel (%p264) target = $region36
      $region35: #{conv2d_subsampling_pallas.1} parent=11 // pred_region
        _
      $region36: #{conv2d_subsampling_pallas.1} parent=11 // pred_fallthru
        _
      // Predicated region
      $region37: #{conv2d_subsampling_pallas.1} parent=11 // pred_check
        %p267 = pneg %p206
      $region38: #{conv2d_subsampling_pallas.1} parent=11 // pred_check_branch
        %269 = sbr.rel (%p267) target = $region40
      $region39: #{conv2d_subsampling_pallas.1} parent=11 // pred_region
        %s270 = smul.u32 4, %s24
        %p271 = scmp.lt.s32.totalorder %s270, 3
        %s272 = scalar_select %p271, %s270, 3
        %s273 = smul.addr %s272, 8
        %s274 = scalar_lea.vmem %s7, %s273
        %s275 = smul.u32 4, %s24
      $region40: #{conv2d_subsampling_pallas.1} parent=11 // pred_fallthru
        _
    $region12: #{conv2d_subsampling_pallas.1} parent=5 // pred_fallthru
      _
    %p276 = scmp.lt.s32.totalorder %s14, 2
    // Predicated region
    $region41: #{conv2d_subsampling_pallas.1} parent=5 // pred_check
      %p277 = pneg %p276
    $region42: #{conv2d_subsampling_pallas.1} parent=5 // pred_check_branch
      %279 = sbr.rel (%p277) target = $region44
    $region43: #{conv2d_subsampling_pallas.1} parent=5 // pred_region
      // Predicated region
      $region45: #{conv2d_subsampling_pallas.1} parent=43 // pred_check
        %p280 = pneg %p48
      $region46: #{conv2d_subsampling_pallas.1} parent=43 // pred_check_branch
        %282 = sbr.rel (%p280) target = $region48
      $region47: #{conv2d_subsampling_pallas.1} parent=43 // pred_region
        %s283 = smul.u32 4, %s22
        %p284 = scmp.lt.s32.totalorder %s21, 1
        %s285 = scalar_select %p284, %s21, 1
        %p286 = scmp.lt.s32.totalorder %s283, 3
        %s287 = scalar_select %p286, %s283, 3
        %s288 = smul.addr %s285, 108
        %s289 = sadd.s32 %s287, %s288
        %s290 = smul.addr %s289, 4
        %s291 = scalar_lea.vmem %s0, %s290
        %s292 = smul.u32 4, %s22
      $region48: #{conv2d_subsampling_pallas.1} parent=43 // pred_fallthru
        _
    $region44: #{conv2d_subsampling_pallas.1} parent=5 // pred_fallthru
      _
    %p293 = scmp.le.s32.totalorder 1, %s14
    %p294 = scmp.lt.s32.totalorder %s14, 3
    %p295 = pnand %p293, %p294
    %p296 = pneg %p295
    // Predicated region
    $region49: #{conv2d_subsampling_pallas.1} parent=5 // pred_check
      _
    $region50: #{conv2d_subsampling_pallas.1} parent=5 // pred_check_branch
      %298 = sbr.rel (%p295) target = $region52
    $region51: #{conv2d_subsampling_pallas.1} parent=5 // pred_region
      %s299 = ssub.s32 %s14, 1
      %s300 = smul.u32 4, %s24
      %p301 = scmp.lt.s32.totalorder %s23, 1
      %s302 = scalar_select %p301, %s23, 1
      %p303 = scmp.lt.s32.totalorder %s300, 3
      %s304 = scalar_select %p303, %s300, 3
      %s305 = smul.addr %s302, 108
      %s306 = sadd.s32 %s304, %s305
      %s307 = smul.addr %s306, 4
      %s308 = scalar_lea.vmem %s0, %s307
      %p309 = pneg %p54
      %p310 = pneg %p51
      %p311 = pneg %p75
      %p312 = pneg %p72
      %p313 = pneg %p96
      %p314 = pneg %p93
      %p315 = pneg %p117
      %p316 = pneg %p114
      %p317 = pneg %p138
      %p318 = pneg %p135
      %p319 = pneg %p159
      %p320 = pneg %p156
      %p321 = pneg %p180
      %p322 = pneg %p177
      %s323 = smul.u32 4, %s24
      %p324 = scmp.lt.s32.totalorder %s323, 3
      %s325 = scalar_select %p324, %s323, 3
      %s326 = smul.addr %s325, 8
      %s327 = scalar_lea.vmem %s7, %s326
      %p328 = pneg %p206
      %p329 = pneg %p203
      %p330 = pneg %p234
      %p331 = pneg %p231
      %s332 = smul.u32 4, %s24
      %p333 = scmp.lt.s32.totalorder %s23, 1
      %s334 = scalar_select %p333, %s23, 1
      %p335 = scmp.lt.s32.totalorder %s332, 3
      %s336 = scalar_select %p335, %s332, 3
      %s337 = smul.addr %s334, 4
      %s338 = sadd.s32 %s336, %s337
      %s339 = smul.addr %s338, 8
      %s340 = scalar_lea.vmem %s8, %s339
      %s341 = smul.u32 4, %s24
      %p342 = scmp.lt.s32.totalorder %s23, 1
      %s343 = scalar_select %p342, %s23, 1
      %p344 = scmp.lt.s32.totalorder %s341, 3
      %s345 = scalar_select %p344, %s341, 3
      %s346 = smul.addr %s343, 108
      %s347 = sadd.s32 %s345, %s346
      %s348 = smul.addr %s347, 4
      %s349 = scalar_lea.vmem %s0, %s348
      %s350 = smul.u32 4, %s24
      %s351 = smul.u32 4, %s24
      %p352 = scmp.lt.s32.totalorder %s351, 3
      %s353 = scalar_select %p352, %s351, 3
      %s354 = smul.addr %s353, 8
      %s355 = scalar_lea.vmem %s7, %s354
      %s356 = smul.u32 4, %s24
      %s357 = smul.u32 4, %s24
      %p358 = scmp.lt.s32.totalorder %s23, 1
      %s359 = scalar_select %p358, %s23, 1
      %p360 = scmp.lt.s32.totalorder %s357, 3
      %s361 = scalar_select %p360, %s357, 3
      %s362 = smul.addr %s359, 4
      %s363 = sadd.s32 %s361, %s362
      %s364 = smul.addr %s363, 8
      %s365 = scalar_lea.vmem %s8, %s364
      %s366 = smul.u32 4, %s24
      %v368 = vld [vmem:[%s349] sm:$0xf]
      %v369 = vld [vmem:[%s349 + $0x4] sm:$0xf]
      %v370 = vld [vmem:[%s349 + $0x8] sm:$0xf]
      %v371 = vld [vmem:[%s349 + $0xc] sm:$0xf]
      %v372 = vld [vmem:[%s349 + $0x10] sm:$0xf]
      %v373 = vld [vmem:[%s349 + $0x14] sm:$0xf]
      %v374 = vld [vmem:[%s349 + $0x18] sm:$0xf]
      %v375 = vld [vmem:[%s349 + $0x1c] sm:$0xf]
      %v376 = vld [vmem:[%s349 + $0x20] sm:$0xf]
      %v377 = vld [vmem:[%s349 + $0x24] sm:$0xf]
      %v378 = vld [vmem:[%s349 + $0x28] sm:$0xf]
      %v379 = vld [vmem:[%s349 + $0x2c] sm:$0xf]
      %v380 = vld [vmem:[%s349 + $0x30] sm:$0xf]
      %v381 = vld [vmem:[%s349 + $0x34] sm:$0xf]
      %v382 = vld [vmem:[%s349 + $0x38] sm:$0xf]
      %v383 = vld [vmem:[%s349 + $0x3c] sm:$0xf]
      %v384 = vld [vmem:[%s349 + $0x40] sm:$0xf]
      %v385 = vld [vmem:[%s349 + $0x44] sm:$0xf]
      %v386 = vld [vmem:[%s349 + $0x48] sm:$0xf]
      %v387 = vld [vmem:[%s349 + $0x4c] sm:$0xf]
      %v388 = vld [vmem:[%s349 + $0x50] sm:$0xf]
      %v389 = vld [vmem:[%s349 + $0x54] sm:$0xf]
      %v390 = vld [vmem:[%s349 + $0x58] sm:$0xf]
      %v391 = vld [vmem:[%s349 + $0x5c] sm:$0xf]
      %v392 = vld [vmem:[%s349 + $0x60] sm:$0xf]
      %v393 = vld [vmem:[%s349 + $0x64] sm:$0xf]
      %v394 = vld [vmem:[%s349 + $0x68] sm:$0xf]
      %v395 = vld [vmem:[%s349 + $0x6c] sm:$0xf]
      %v396 = vld [vmem:[%s349 + $0x70] sm:$0xf]
      %v397 = vld [vmem:[%s349 + $0x74] sm:$0xf]
      %v398 = vld [vmem:[%s349 + $0x78] sm:$0xf]
      %v399 = vld [vmem:[%s349 + $0x7c] sm:$0xf]
      %v400 = vld [vmem:[%s349 + $0x80] sm:$0xf]
      %v401 = vld [vmem:[%s349 + $0x84] sm:$0xf]
      %v402 = vld [vmem:[%s349 + $0x88] sm:$0xf]
      %v403 = vld [vmem:[%s349 + $0x8c] sm:$0xf]
      %v404 = vld [vmem:[%s349 + $0x90] sm:$0xf]
      %v405 = vld [vmem:[%s349 + $0x94] sm:$0xf]
      %v406 = vld [vmem:[%s349 + $0x98] sm:$0xf]
      %v407 = vld [vmem:[%s349 + $0x9c] sm:$0xf]
      %v408 = vld [vmem:[%s349 + $0xa0] sm:$0xf]
      %v409 = vld [vmem:[%s349 + $0xa4] sm:$0xf]
      %v410 = vld [vmem:[%s349 + $0xa8] sm:$0xf]
      %v411 = vld [vmem:[%s349 + $0xac] sm:$0xf]
      %v412 = vld [vmem:[%s349 + $0xb0] sm:$0xf]
      %v413 = vld [vmem:[%s349 + $0xb4] sm:$0xf]
      %v414 = vld [vmem:[%s349 + $0xb8] sm:$0xf]
      %v415 = vld [vmem:[%s349 + $0xbc] sm:$0xf]
      %v416 = vld [vmem:[%s349 + $0xc0] sm:$0xf]
      %v417 = vld [vmem:[%s349 + $0xc4] sm:$0xf]
      %v418 = vld [vmem:[%s349 + $0xc8] sm:$0xf]
      %v419 = vld [vmem:[%s349 + $0xcc] sm:$0xf]
      %v420 = vld [vmem:[%s349 + $0xd0] sm:$0xf]
      %v421 = vld [vmem:[%s349 + $0xd4] sm:$0xf]
      %v422 = vld [vmem:[%s349 + $0xd8] sm:$0xf]
      %v423 = vld [vmem:[%s349 + $0xdc] sm:$0xf]
      %v424 = vld [vmem:[%s349 + $0xe0] sm:$0xf]
      %v425 = vld [vmem:[%s349 + $0xe4] sm:$0xf]
      %v426 = vld [vmem:[%s349 + $0xe8] sm:$0xf]
      %v427 = vld [vmem:[%s349 + $0xec] sm:$0xf]
      %v428 = vld [vmem:[%s349 + $0xf0] sm:$0xf]
      %v429 = vld [vmem:[%s349 + $0xf4] sm:$0xf]
      %v430 = vld [vmem:[%s349 + $0xf8] sm:$0xf]
      %v431 = vld [vmem:[%s349 + $0xfc] sm:$0xf]
      %v432 = vld [vmem:[%s349 + $0x100] sm:$0xf]
      %v433 = vld [vmem:[%s349 + $0x104] sm:$0xf]
      %v434 = vld [vmem:[%s349 + $0x108] sm:$0xf]
      %v435 = vld [vmem:[%s349 + $0x10c] sm:$0xf]
      %v436 = vld [vmem:[%s349 + $0x110] sm:$0xf]
      %v437 = vld [vmem:[%s349 + $0x114] sm:$0xf]
      %v438 = vld [vmem:[%s349 + $0x118] sm:$0xf]
      %v439 = vld [vmem:[%s349 + $0x11c] sm:$0xf]
      %v440 = vld [vmem:[%s349 + $0x120] sm:$0xf]
      %v441 = vld [vmem:[%s349 + $0x124] sm:$0xf]
      %v442 = vld [vmem:[%s349 + $0x128] sm:$0xf]
      %v443 = vld [vmem:[%s349 + $0x12c] sm:$0xf]
      %v444 = vld [vmem:[%s349 + $0x130] sm:$0xf]
      %v445 = vld [vmem:[%s349 + $0x134] sm:$0xf]
      %v446 = vld [vmem:[%s349 + $0x138] sm:$0xf]
      %v447 = vld [vmem:[%s349 + $0x13c] sm:$0xf]
      %v448 = vld [vmem:[%s349 + $0x140] sm:$0xf]
      %v449 = vld [vmem:[%s349 + $0x144] sm:$0xf]
      %v450 = vld [vmem:[%s349 + $0x148] sm:$0xf]
      %v451 = vld [vmem:[%s349 + $0x14c] sm:$0xf]
      %v452 = vld [vmem:[%s349 + $0x150] sm:$0xf]
      %v453 = vld [vmem:[%s349 + $0x154] sm:$0xf]
      %v454 = vld [vmem:[%s349 + $0x158] sm:$0xf]
      %v455 = vld [vmem:[%s349 + $0x15c] sm:$0xf]
      %v456 = vld [vmem:[%s349 + $0x160] sm:$0xf]
      %v457 = vld [vmem:[%s349 + $0x164] sm:$0xf]
      %v458 = vld [vmem:[%s349 + $0x168] sm:$0xf]
      %v459 = vld [vmem:[%s349 + $0x16c] sm:$0xf]
      %v460 = vld [vmem:[%s349 + $0x170] sm:$0xf]
      %v461 = vld [vmem:[%s349 + $0x174] sm:$0xf]
      %v462 = vld [vmem:[%s349 + $0x178] sm:$0xf]
      %v463 = vld [vmem:[%s349 + $0x17c] sm:$0xf]
      %v464 = vld [vmem:[%s349 + $0x180] sm:$0xf]
      %v465 = vld [vmem:[%s349 + $0x184] sm:$0xf]
      %v466 = vld [vmem:[%s349 + $0x188] sm:$0xf]
      %v467 = vld [vmem:[%s349 + $0x18c] sm:$0xf]
      %v468 = vld [vmem:[%s349 + $0x190] sm:$0xf]
      %v469 = vld [vmem:[%s349 + $0x194] sm:$0xf]
      %v470 = vld [vmem:[%s349 + $0x198] sm:$0xf]
      %v471 = vld [vmem:[%s349 + $0x19c] sm:$0xf]
      %v472 = vld [vmem:[%s349 + $0x1a0] sm:$0xf]
      %v473 = vld [vmem:[%s349 + $0x1a4] sm:$0xf]
      %v474 = vld [vmem:[%s349 + $0x1a8] sm:$0xf]
      %v475 = vld [vmem:[%s349 + $0x1ac] sm:$0xf]
      %v476 = vld [vmem:[%s1] sm:$0xf]
      %v477 = vld [vmem:[%s1 + $0x4] sm:$0x1]
      %v478 = vld [vmem:[%s2] sm:$0x1]
      %v480 = vlaneseq
      %v481 = vshrl.u32 %v480, 7
      %v482 = vsub.s32 0, %v481
      %v483 = vrot.slane %v478, %v482
      %v593 = vunpack.c.l.b16 %v368
      %v594 = vunpack.c.l.b16 %v369
      %v595 = vunpack.c.l.b16 %v370
      %v596 = vunpack.c.l.b16 %v371
      %v597 = vunpack.c.l.b16 %v372
      %v598 = vunpack.c.l.b16 %v373
      %v599 = vunpack.c.l.b16 %v374
      %v600 = vunpack.c.l.b16 %v375
      %v601 = vunpack.c.l.b16 %v376
      %v602 = vunpack.c.l.b16 %v377
      %v603 = vunpack.c.l.b16 %v378
      %v604 = vunpack.c.l.b16 %v379
      %v605 = vunpack.c.l.b16 %v380
      %v606 = vunpack.c.l.b16 %v381
      %v607 = vunpack.c.l.b16 %v382
      %v608 = vunpack.c.l.b16 %v383
      %v609 = vunpack.c.l.b16 %v384
      %v610 = vunpack.c.l.b16 %v385
      %v611 = vunpack.c.l.b16 %v386
      %v612 = vunpack.c.l.b16 %v387
      %v613 = vunpack.c.l.b16 %v388
      %v614 = vunpack.c.l.b16 %v389
      %v615 = vunpack.c.l.b16 %v390
      %v616 = vunpack.c.l.b16 %v391
      %v617 = vunpack.c.l.b16 %v392
      %v618 = vunpack.c.l.b16 %v393
      %v619 = vunpack.c.l.b16 %v394
      %v620 = vunpack.c.l.b16 %v395
      %v621 = vunpack.c.l.b16 %v396
      %v622 = vunpack.c.l.b16 %v397
      %v623 = vunpack.c.l.b16 %v398
      %v624 = vunpack.c.l.b16 %v399
      %v625 = vunpack.c.l.b16 %v400
      %v626 = vunpack.c.l.b16 %v401
      %v627 = vunpack.c.l.b16 %v402
      %v628 = vunpack.c.l.b16 %v403
      %v629 = vunpack.c.l.b16 %v404
      %v630 = vunpack.c.l.b16 %v405
      %v631 = vunpack.c.l.b16 %v406
      %v632 = vunpack.c.l.b16 %v407
      %v633 = vunpack.c.l.b16 %v408
      %v634 = vunpack.c.l.b16 %v409
      %v635 = vunpack.c.l.b16 %v410
      %v636 = vunpack.c.l.b16 %v411
      %v637 = vunpack.c.l.b16 %v412
      %v638 = vunpack.c.l.b16 %v413
      %v639 = vunpack.c.l.b16 %v414
      %v640 = vunpack.c.l.b16 %v415
      %v641 = vunpack.c.l.b16 %v416
      %v642 = vunpack.c.l.b16 %v417
      %v643 = vunpack.c.l.b16 %v418
      %v644 = vunpack.c.l.b16 %v419
      %v645 = vunpack.c.l.b16 %v420
      %v646 = vunpack.c.l.b16 %v421
      %v647 = vunpack.c.l.b16 %v422
      %v648 = vunpack.c.l.b16 %v423
      %v649 = vunpack.c.l.b16 %v424
      %v650 = vunpack.c.l.b16 %v425
      %v651 = vunpack.c.l.b16 %v426
      %v652 = vunpack.c.l.b16 %v427
      %v653 = vunpack.c.l.b16 %v428
      %v654 = vunpack.c.l.b16 %v429
      %v655 = vunpack.c.l.b16 %v430
      %v656 = vunpack.c.l.b16 %v431
      %v657 = vunpack.c.l.b16 %v432
      %v658 = vunpack.c.l.b16 %v433
      %v659 = vunpack.c.l.b16 %v434
      %v660 = vunpack.c.l.b16 %v435
      %v661 = vunpack.c.l.b16 %v436
      %v662 = vunpack.c.l.b16 %v437
      %v663 = vunpack.c.l.b16 %v438
      %v664 = vunpack.c.l.b16 %v439
      %v665 = vunpack.c.l.b16 %v440
      %v666 = vunpack.c.l.b16 %v441
      %v667 = vunpack.c.l.b16 %v442
      %v668 = vunpack.c.l.b16 %v443
      %v669 = vunpack.c.l.b16 %v444
      %v670 = vunpack.c.l.b16 %v445
      %v671 = vunpack.c.l.b16 %v446
      %v672 = vunpack.c.l.b16 %v447
      %v673 = vunpack.c.l.b16 %v448
      %v674 = vunpack.c.l.b16 %v449
      %v675 = vunpack.c.l.b16 %v450
      %v676 = vunpack.c.l.b16 %v451
      %v677 = vunpack.c.l.b16 %v452
      %v678 = vunpack.c.l.b16 %v453
      %v679 = vunpack.c.l.b16 %v454
      %v680 = vunpack.c.l.b16 %v455
      %v681 = vunpack.c.l.b16 %v456
      %v682 = vunpack.c.l.b16 %v457
      %v683 = vunpack.c.l.b16 %v458
      %v684 = vunpack.c.l.b16 %v459
      %v685 = vunpack.c.l.b16 %v460
      %v686 = vunpack.c.l.b16 %v461
      %v687 = vunpack.c.l.b16 %v462
      %v688 = vunpack.c.l.b16 %v463
      %v689 = vunpack.c.l.b16 %v464
      %v690 = vunpack.c.l.b16 %v465
      %v691 = vunpack.c.l.b16 %v466
      %v692 = vunpack.c.l.b16 %v467
      %v693 = vunpack.c.l.b16 %v468
      %v694 = vunpack.c.l.b16 %v469
      %v695 = vunpack.c.l.b16 %v470
      %v696 = vunpack.c.l.b16 %v471
      %v697 = vunpack.c.l.b16 %v472
      %v698 = vunpack.c.l.b16 %v473
      %v699 = vunpack.c.l.b16 %v474
      %v700 = vunpack.c.l.b16 %v475
      %v701 = vpack.c.b16 %v594, %v593
      %v702 = vpack.c.b16 %v596, %v595
      %v703 = vpack.c.b16 %v598, %v597
      %v704 = vpack.c.b16 %v600, %v599
      %v705 = vpack.c.b16 %v602, %v601
      %v706 = vpack.c.b16 %v604, %v603
      %v707 = vpack.c.b16 %v606, %v605
      %v708 = vpack.c.b16 %v608, %v607
      %v709 = vpack.c.b16 %v610, %v609
      %v710 = vpack.c.b16 %v612, %v611
      %v711 = vpack.c.b16 %v614, %v613
      %v712 = vpack.c.b16 %v616, %v615
      %v713 = vpack.c.b16 %v618, %v617
      %v714 = vpack.c.b16 %v620, %v619
      %v715 = vpack.c.b16 %v622, %v621
      %v716 = vpack.c.b16 %v624, %v623
      %v717 = vpack.c.b16 %v626, %v625
      %v718 = vpack.c.b16 %v628, %v627
      %v719 = vpack.c.b16 %v630, %v629
      %v720 = vpack.c.b16 %v632, %v631
      %v721 = vpack.c.b16 %v634, %v633
      %v722 = vpack.c.b16 %v636, %v635
      %v723 = vpack.c.b16 %v638, %v637
      %v724 = vpack.c.b16 %v640, %v639
      %v725 = vpack.c.b16 %v642, %v641
      %v726 = vpack.c.b16 %v644, %v643
      %v727 = vpack.c.b16 %v646, %v645
      %v728 = vpack.c.b16 %v648, %v647
      %v729 = vpack.c.b16 %v650, %v649
      %v730 = vpack.c.b16 %v652, %v651
      %v731 = vpack.c.b16 %v654, %v653
      %v732 = vpack.c.b16 %v656, %v655
      %v733 = vpack.c.b16 %v658, %v657
      %v734 = vpack.c.b16 %v660, %v659
      %v735 = vpack.c.b16 %v662, %v661
      %v736 = vpack.c.b16 %v664, %v663
      %v737 = vpack.c.b16 %v666, %v665
      %v738 = vpack.c.b16 %v668, %v667
      %v739 = vpack.c.b16 %v670, %v669
      %v740 = vpack.c.b16 %v672, %v671
      %v741 = vpack.c.b16 %v674, %v673
      %v742 = vpack.c.b16 %v676, %v675
      %v743 = vpack.c.b16 %v678, %v677
      %v744 = vpack.c.b16 %v680, %v679
      %v745 = vpack.c.b16 %v682, %v681
      %v746 = vpack.c.b16 %v684, %v683
      %v747 = vpack.c.b16 %v686, %v685
      %v748 = vpack.c.b16 %v688, %v687
      %v749 = vpack.c.b16 %v690, %v689
      %v750 = vpack.c.b16 %v692, %v691
      %v751 = vpack.c.b16 %v694, %v693
      %v752 = vpack.c.b16 %v696, %v695
      %v753 = vpack.c.b16 %v698, %v697
      %v754 = vpack.c.b16 %v700, %v699
      %v757 = vunpack.c.l.b16 %v476
      %v758 = vunpack.c.l.b16 %v477
      %v759 = vpack.c.b16 %v758, %v757
      %vm760 = vcmask 72704
      %v762 = vsel %vm760, %v701, 0
      %v765 = vsel %vm760, %v702, 0
      %v768 = vsel %vm760, %v703, 0
      %v771 = vsel %vm760, %v704, 0
      %v774 = vsel %vm760, %v705, 0
      %v777 = vsel %vm760, %v706, 0
      %v780 = vsel %vm760, %v707, 0
      %v783 = vsel %vm760, %v708, 0
      %v786 = vsel %vm760, %v709, 0
      %v789 = vsel %vm760, %v710, 0
      %v792 = vsel %vm760, %v711, 0
      %v795 = vsel %vm760, %v712, 0
      %v798 = vsel %vm760, %v713, 0
      %v801 = vsel %vm760, %v714, 0
      %v804 = vsel %vm760, %v715, 0
      %v807 = vsel %vm760, %v716, 0
      %v810 = vsel %vm760, %v717, 0
      %v813 = vsel %vm760, %v718, 0
      %v816 = vsel %vm760, %v719, 0
      %v819 = vsel %vm760, %v720, 0
      %v822 = vsel %vm760, %v721, 0
      %v825 = vsel %vm760, %v722, 0
      %v828 = vsel %vm760, %v723, 0
      %v831 = vsel %vm760, %v724, 0
      %v834 = vsel %vm760, %v725, 0
      %v837 = vsel %vm760, %v726, 0
      %v840 = vsel %vm760, %v727, 0
      %v843 = vsel %vm760, %v728, 0
      %v846 = vsel %vm760, %v729, 0
      %v849 = vsel %vm760, %v730, 0
      %v852 = vsel %vm760, %v731, 0
      %v855 = vsel %vm760, %v732, 0
      %v858 = vsel %vm760, %v733, 0
      %v861 = vsel %vm760, %v734, 0
      %v864 = vsel %vm760, %v735, 0
      %v867 = vsel %vm760, %v736, 0
      %v870 = vsel %vm760, %v737, 0
      %v873 = vsel %vm760, %v738, 0
      %v876 = vsel %vm760, %v739, 0
      %v879 = vsel %vm760, %v740, 0
      %v882 = vsel %vm760, %v741, 0
      %v885 = vsel %vm760, %v742, 0
      %v888 = vsel %vm760, %v743, 0
      %v891 = vsel %vm760, %v744, 0
      %v894 = vsel %vm760, %v745, 0
      %v897 = vsel %vm760, %v746, 0
      %v900 = vsel %vm760, %v747, 0
      %v903 = vsel %vm760, %v748, 0
      %v906 = vsel %vm760, %v749, 0
      %v909 = vsel %vm760, %v750, 0
      %v912 = vsel %vm760, %v751, 0
      %v915 = vsel %vm760, %v752, 0
      %v918 = vsel %vm760, %v753, 0
      %v921 = vsel %vm760, %v754, 0
      %vm923 = vcmask 1043456
      %vm924 = vcmask 1044480
      %v925 = vsel %vm923, 4294967295, 65535
      %v926 = vsel %vm924, %v925, 0
      %v928 = vand.u32 %v759, %v926
      %930 = vmatprep.subr.bf16.mxu0 0
      %931 = vmatpush1.bf16.msra.mxu0 0
      %932 = vmatprep.subr.bf16.mxu0 0
      %933 = vmatpush1.bf16.msra.mxu0 0
      %934 = vmatprep.subr.bf16.mxu0 0
      %935 = vmatpush1.bf16.msra.mxu0 0
      %936 = vmatprep.subr.bf16.mxu0 0
      %937 = vmatpush1.bf16.msra.mxu0 0
      %938 = vmatprep.subr.bf16.mxu0 0
      %939 = vmatpush1.bf16.msra.mxu0 0
      %940 = vmatprep.subr.bf16.mxu0 0
      %941 = vmatpush1.bf16.msra.mxu0 0
      %942 = vmatprep.subr.bf16.mxu0 0
      %943 = vmatpush1.bf16.msra.mxu0 0
      %944 = vmatprep.subr.bf16.mxu0 0
      %945 = vmatpush1.bf16.msra.mxu0 %v928
      %946 = vmatprep.subr.bf16.mxu0 0
      %947 = vmatpush2.bf16.msra.mxu0 0
      %948 = vmatprep.subr.bf16.mxu0 0
      %949 = vmatpush2.bf16.msra.mxu0 0
      %950 = vmatprep.subr.bf16.mxu0 0
      %951 = vmatpush2.bf16.msra.mxu0 0
      %952 = vmatprep.subr.bf16.mxu0 0
      %953 = vmatpush2.bf16.msra.mxu0 0
      %954 = vmatprep.subr.bf16.mxu0 0
      %955 = vmatpush2.bf16.msra.mxu0 0
      %956 = vmatprep.subr.bf16.mxu0 0
      %957 = vmatpush2.bf16.msra.mxu0 0
      %958 = vmatprep.subr.bf16.mxu0 0
      %959 = vmatpush2.bf16.msra.mxu0 0
      %960 = vmatprep.subr.bf16.mxu0 0
      %961 = vmatpush2.bf16.msra.mxu0 0
      %962 = vmatprep.mubr.bf16.mxu0 0
      %963 = vmatmul.mubr.bf16.gmra.mxu0 %v762
      %v964 = vpop.f32.mrf.mxu0
      %v965 = vadd.f32 %v483, %v964
      %v966 = vpop.f32.mrf.mxu0
      %v967 = vpop.f32.mrf.mxu0
      %v968 = vadd.f32 %v483, %v967
      %v969 = vpop.f32.mrf.mxu0
      %970 = vmatprep.mubr.bf16.mxu0 0
      %971 = vmatmul.mubr.bf16.gmra.mxu0 %v765
      %v972 = vpop.f32.mrf.mxu0
      %v973 = vadd.f32 %v483, %v972
      %v974 = vpop.f32.mrf.mxu0
      %v975 = vpop.f32.mrf.mxu0
      %v976 = vadd.f32 %v483, %v975
      %v977 = vpop.f32.mrf.mxu0
      %978 = vmatprep.mubr.bf16.mxu0 0
      %979 = vmatmul.mubr.bf16.gmra.mxu0 %v768
      %v980 = vpop.f32.mrf.mxu0
      %v981 = vadd.f32 %v483, %v980
      %v982 = vpop.f32.mrf.mxu0
      %v983 = vpop.f32.mrf.mxu0
      %v984 = vadd.f32 %v483, %v983
      %v985 = vpop.f32.mrf.mxu0
      %986 = vmatprep.mubr.bf16.mxu0 0
      %987 = vmatmul.mubr.bf16.gmra.mxu0 %v771
      %v988 = vpop.f32.mrf.mxu0
      %v989 = vadd.f32 %v483, %v988
      %v990 = vpop.f32.mrf.mxu0
      %v991 = vpop.f32.mrf.mxu0
      %v992 = vadd.f32 %v483, %v991
      %v993 = vpop.f32.mrf.mxu0
      %994 = vmatprep.mubr.bf16.mxu0 0
      %995 = vmatmul.mubr.bf16.gmra.mxu0 %v774
      %v996 = vpop.f32.mrf.mxu0
      %v997 = vadd.f32 %v483, %v996
      %v998 = vpop.f32.mrf.mxu0
      %v999 = vpop.f32.mrf.mxu0
      %v1000 = vadd.f32 %v483, %v999
      %v1001 = vpop.f32.mrf.mxu0
      %1002 = vmatprep.mubr.bf16.mxu0 0
      %1003 = vmatmul.mubr.bf16.gmra.mxu0 %v777
      %v1004 = vpop.f32.mrf.mxu0
      %v1005 = vadd.f32 %v483, %v1004
      %v1006 = vpop.f32.mrf.mxu0
      %v1007 = vpop.f32.mrf.mxu0
      %v1008 = vadd.f32 %v483, %v1007
      %v1009 = vpop.f32.mrf.mxu0
      %1010 = vmatprep.mubr.bf16.mxu0 0
      %1011 = vmatmul.mubr.bf16.gmra.mxu0 %v780
      %v1012 = vpop.f32.mrf.mxu0
      %v1013 = vadd.f32 %v483, %v1012
      %v1014 = vpop.f32.mrf.mxu0
      %v1015 = vpop.f32.mrf.mxu0
      %v1016 = vadd.f32 %v483, %v1015
      %v1017 = vpop.f32.mrf.mxu0
      %1018 = vmatprep.mubr.bf16.mxu0 0
      %1019 = vmatmul.mubr.bf16.gmra.mxu0 %v783
      %v1020 = vpop.f32.mrf.mxu0
      %v1021 = vadd.f32 %v483, %v1020
      %v1022 = vpop.f32.mrf.mxu0
      %v1023 = vpop.f32.mrf.mxu0
      %v1024 = vadd.f32 %v483, %v1023
      %v1025 = vpop.f32.mrf.mxu0
      %1026 = vmatprep.mubr.bf16.mxu0 0
      %1027 = vmatmul.mubr.bf16.gmra.mxu0 %v786
      %v1028 = vpop.f32.mrf.mxu0
      %v1029 = vadd.f32 %v483, %v1028
      %v1030 = vpop.f32.mrf.mxu0
      %v1031 = vpop.f32.mrf.mxu0
      %v1032 = vadd.f32 %v483, %v1031
      %v1033 = vpop.f32.mrf.mxu0
      %1034 = vmatprep.mubr.bf16.mxu0 0
      %1035 = vmatmul.mubr.bf16.gmra.mxu0 %v789
      %v1036 = vpop.f32.mrf.mxu0
      %v1037 = vadd.f32 %v483, %v1036
      %v1038 = vpop.f32.mrf.mxu0
      %v1039 = vpop.f32.mrf.mxu0
      %v1040 = vadd.f32 %v483, %v1039
      %v1041 = vpop.f32.mrf.mxu0
      %1042 = vmatprep.mubr.bf16.mxu0 0
      %1043 = vmatmul.mubr.bf16.gmra.mxu0 %v792
      %v1044 = vpop.f32.mrf.mxu0
      %v1045 = vadd.f32 %v483, %v1044
      %v1046 = vpop.f32.mrf.mxu0
      %v1047 = vpop.f32.mrf.mxu0
      %v1048 = vadd.f32 %v483, %v1047
      %v1049 = vpop.f32.mrf.mxu0
      %1050 = vmatprep.mubr.bf16.mxu0 0
      %1051 = vmatmul.mubr.bf16.gmra.mxu0 %v795
      %v1052 = vpop.f32.mrf.mxu0
      %v1053 = vadd.f32 %v483, %v1052
      %v1054 = vpop.f32.mrf.mxu0
      %v1055 = vpop.f32.mrf.mxu0
      %v1056 = vadd.f32 %v483, %v1055
      %v1057 = vpop.f32.mrf.mxu0
      %1058 = vmatprep.mubr.bf16.mxu0 0
      %1059 = vmatmul.mubr.bf16.gmra.mxu0 %v798
      %v1060 = vpop.f32.mrf.mxu0
      %v1061 = vadd.f32 %v483, %v1060
      %v1062 = vpop.f32.mrf.mxu0
      %v1063 = vpop.f32.mrf.mxu0
      %v1064 = vadd.f32 %v483, %v1063
      %v1065 = vpop.f32.mrf.mxu0
      %1066 = vmatprep.mubr.bf16.mxu0 0
      %1067 = vmatmul.mubr.bf16.gmra.mxu0 %v801
      %v1068 = vpop.f32.mrf.mxu0
      %v1069 = vadd.f32 %v483, %v1068
      %v1070 = vpop.f32.mrf.mxu0
      %v1071 = vpop.f32.mrf.mxu0
      %v1072 = vadd.f32 %v483, %v1071
      %v1073 = vpop.f32.mrf.mxu0
      %1074 = vmatprep.mubr.bf16.mxu0 0
      %1075 = vmatmul.mubr.bf16.gmra.mxu0 %v804
      %v1076 = vpop.f32.mrf.mxu0
      %v1077 = vadd.f32 %v483, %v1076
      %v1078 = vpop.f32.mrf.mxu0
      %v1079 = vpop.f32.mrf.mxu0
      %v1080 = vadd.f32 %v483, %v1079
      %v1081 = vpop.f32.mrf.mxu0
      %1082 = vmatprep.mubr.bf16.mxu0 0
      %1083 = vmatmul.mubr.bf16.gmra.mxu0 %v807
      %v1084 = vpop.f32.mrf.mxu0
      %v1085 = vadd.f32 %v483, %v1084
      %v1086 = vpop.f32.mrf.mxu0
      %v1087 = vpop.f32.mrf.mxu0
      %v1088 = vadd.f32 %v483, %v1087
      %v1089 = vpop.f32.mrf.mxu0
      %1090 = vmatprep.mubr.bf16.mxu0 0
      %1091 = vmatmul.mubr.bf16.gmra.mxu0 %v810
      %v1092 = vpop.f32.mrf.mxu0
      %v1093 = vadd.f32 %v483, %v1092
      %v1094 = vpop.f32.mrf.mxu0
      %v1095 = vpop.f32.mrf.mxu0
      %v1096 = vadd.f32 %v483, %v1095
      %v1097 = vpop.f32.mrf.mxu0
      %1098 = vmatprep.mubr.bf16.mxu0 0
      %1099 = vmatmul.mubr.bf16.gmra.mxu0 %v813
      %v1100 = vpop.f32.mrf.mxu0
      %v1101 = vadd.f32 %v483, %v1100
      %v1102 = vpop.f32.mrf.mxu0
      %v1103 = vpop.f32.mrf.mxu0
      %v1104 = vadd.f32 %v483, %v1103
      %v1105 = vpop.f32.mrf.mxu0
      %1106 = vmatprep.mubr.bf16.mxu0 0
      %1107 = vmatmul.mubr.bf16.gmra.mxu0 %v816
      %v1108 = vpop.f32.mrf.mxu0
      %v1109 = vadd.f32 %v483, %v1108
      %v1110 = vpop.f32.mrf.mxu0
      %v1111 = vpop.f32.mrf.mxu0
      %v1112 = vadd.f32 %v483, %v1111
      %v1113 = vpop.f32.mrf.mxu0
      %1114 = vmatprep.mubr.bf16.mxu0 0
      %1115 = vmatmul.mubr.bf16.gmra.mxu0 %v819
      %v1116 = vpop.f32.mrf.mxu0
      %v1117 = vadd.f32 %v483, %v1116
      %v1118 = vpop.f32.mrf.mxu0
      %v1119 = vpop.f32.mrf.mxu0
      %v1120 = vadd.f32 %v483, %v1119
      %v1121 = vpop.f32.mrf.mxu0
      %1122 = vmatprep.mubr.bf16.mxu0 0
      %1123 = vmatmul.mubr.bf16.gmra.mxu0 %v822
      %v1124 = vpop.f32.mrf.mxu0
      %v1125 = vadd.f32 %v483, %v1124
      %v1126 = vpop.f32.mrf.mxu0
      %v1127 = vpop.f32.mrf.mxu0
      %v1128 = vadd.f32 %v483, %v1127
      %v1129 = vpop.f32.mrf.mxu0
      %1130 = vmatprep.mubr.bf16.mxu0 0
      %1131 = vmatmul.mubr.bf16.gmra.mxu0 %v825
      %v1132 = vpop.f32.mrf.mxu0
      %v1133 = vadd.f32 %v483, %v1132
      %v1134 = vpop.f32.mrf.mxu0
      %v1135 = vpop.f32.mrf.mxu0
      %v1136 = vadd.f32 %v483, %v1135
      %v1137 = vpop.f32.mrf.mxu0
      %1138 = vmatprep.mubr.bf16.mxu0 0
      %1139 = vmatmul.mubr.bf16.gmra.mxu0 %v828
      %v1140 = vpop.f32.mrf.mxu0
      %v1141 = vadd.f32 %v483, %v1140
      %v1142 = vpop.f32.mrf.mxu0
      %v1143 = vpop.f32.mrf.mxu0
      %v1144 = vadd.f32 %v483, %v1143
      %v1145 = vpop.f32.mrf.mxu0
      %1146 = vmatprep.mubr.bf16.mxu0 0
      %1147 = vmatmul.mubr.bf16.gmra.mxu0 %v831
      %v1148 = vpop.f32.mrf.mxu0
      %v1149 = vadd.f32 %v483, %v1148
      %v1150 = vpop.f32.mrf.mxu0
      %v1151 = vpop.f32.mrf.mxu0
      %v1152 = vadd.f32 %v483, %v1151
      %v1153 = vpop.f32.mrf.mxu0
      %1154 = vmatprep.mubr.bf16.mxu0 0
      %1155 = vmatmul.mubr.bf16.gmra.mxu0 %v834
      %v1156 = vpop.f32.mrf.mxu0
      %v1157 = vadd.f32 %v483, %v1156
      %v1158 = vpop.f32.mrf.mxu0
      %v1159 = vpop.f32.mrf.mxu0
      %v1160 = vadd.f32 %v483, %v1159
      %v1161 = vpop.f32.mrf.mxu0
      %1162 = vmatprep.mubr.bf16.mxu0 0
      %1163 = vmatmul.mubr.bf16.gmra.mxu0 %v837
      %v1164 = vpop.f32.mrf.mxu0
      %v1165 = vadd.f32 %v483, %v1164
      %v1166 = vpop.f32.mrf.mxu0
      %v1167 = vpop.f32.mrf.mxu0
      %v1168 = vadd.f32 %v483, %v1167
      %v1169 = vpop.f32.mrf.mxu0
      %1170 = vmatprep.mubr.bf16.mxu0 0
      %1171 = vmatmul.mubr.bf16.gmra.mxu0 %v840
      %v1172 = vpop.f32.mrf.mxu0
      %v1173 = vadd.f32 %v483, %v1172
      %v1174 = vpop.f32.mrf.mxu0
      %v1175 = vpop.f32.mrf.mxu0
      %v1176 = vadd.f32 %v483, %v1175
      %v1177 = vpop.f32.mrf.mxu0
      %1178 = vmatprep.mubr.bf16.mxu0 0
      %1179 = vmatmul.mubr.bf16.gmra.mxu0 %v843
      %v1180 = vpop.f32.mrf.mxu0
      %v1181 = vadd.f32 %v483, %v1180
      %v1182 = vpop.f32.mrf.mxu0
      %v1183 = vpop.f32.mrf.mxu0
      %v1184 = vadd.f32 %v483, %v1183
      %v1185 = vpop.f32.mrf.mxu0
      %1186 = vmatprep.mubr.bf16.mxu0 0
      %1187 = vmatmul.mubr.bf16.gmra.mxu0 %v846
      %v1188 = vpop.f32.mrf.mxu0
      %v1189 = vadd.f32 %v483, %v1188
      %v1190 = vpop.f32.mrf.mxu0
      %v1191 = vpop.f32.mrf.mxu0
      %v1192 = vadd.f32 %v483, %v1191
      %v1193 = vpop.f32.mrf.mxu0
      %1194 = vmatprep.mubr.bf16.mxu0 0
      %1195 = vmatmul.mubr.bf16.gmra.mxu0 %v849
      %v1196 = vpop.f32.mrf.mxu0
      %v1197 = vadd.f32 %v483, %v1196
      %v1198 = vpop.f32.mrf.mxu0
      %v1199 = vpop.f32.mrf.mxu0
      %v1200 = vadd.f32 %v483, %v1199
      %v1201 = vpop.f32.mrf.mxu0
      %1202 = vmatprep.mubr.bf16.mxu0 0
      %1203 = vmatmul.mubr.bf16.gmra.mxu0 %v852
      %v1204 = vpop.f32.mrf.mxu0
      %v1205 = vadd.f32 %v483, %v1204
      %v1206 = vpop.f32.mrf.mxu0
      %v1207 = vpop.f32.mrf.mxu0
      %v1208 = vadd.f32 %v483, %v1207
      %v1209 = vpop.f32.mrf.mxu0
      %1210 = vmatprep.mubr.bf16.mxu0 0
      %1211 = vmatmul.mubr.bf16.gmra.mxu0 %v855
      %v1212 = vpop.f32.mrf.mxu0
      %v1213 = vadd.f32 %v483, %v1212
      %v1214 = vpop.f32.mrf.mxu0
      %v1215 = vpop.f32.mrf.mxu0
      %v1216 = vadd.f32 %v483, %v1215
      %v1217 = vpop.f32.mrf.mxu0
      %1218 = vmatprep.mubr.bf16.mxu0 0
      %1219 = vmatmul.mubr.bf16.gmra.mxu0 %v858
      %v1220 = vpop.f32.mrf.mxu0
      %v1221 = vadd.f32 %v483, %v1220
      %v1222 = vpop.f32.mrf.mxu0
      %v1223 = vpop.f32.mrf.mxu0
      %v1224 = vadd.f32 %v483, %v1223
      %v1225 = vpop.f32.mrf.mxu0
      %1226 = vmatprep.mubr.bf16.mxu0 0
      %1227 = vmatmul.mubr.bf16.gmra.mxu0 %v861
      %v1228 = vpop.f32.mrf.mxu0
      %v1229 = vadd.f32 %v483, %v1228
      %v1230 = vpop.f32.mrf.mxu0
      %v1231 = vpop.f32.mrf.mxu0
      %v1232 = vadd.f32 %v483, %v1231
      %v1233 = vpop.f32.mrf.mxu0
      %1234 = vmatprep.mubr.bf16.mxu0 0
      %1235 = vmatmul.mubr.bf16.gmra.mxu0 %v864
      %v1236 = vpop.f32.mrf.mxu0
      %v1237 = vadd.f32 %v483, %v1236
      %v1238 = vpop.f32.mrf.mxu0
      %v1239 = vpop.f32.mrf.mxu0
      %v1240 = vadd.f32 %v483, %v1239
      %v1241 = vpop.f32.mrf.mxu0
      %1242 = vmatprep.mubr.bf16.mxu0 0
      %1243 = vmatmul.mubr.bf16.gmra.mxu0 %v867
      %v1244 = vpop.f32.mrf.mxu0
      %v1245 = vadd.f32 %v483, %v1244
      %v1246 = vpop.f32.mrf.mxu0
      %v1247 = vpop.f32.mrf.mxu0
      %v1248 = vadd.f32 %v483, %v1247
      %v1249 = vpop.f32.mrf.mxu0
      %1250 = vmatprep.mubr.bf16.mxu0 0
      %1251 = vmatmul.mubr.bf16.gmra.mxu0 %v870
      %v1252 = vpop.f32.mrf.mxu0
      %v1253 = vadd.f32 %v483, %v1252
      %v1254 = vpop.f32.mrf.mxu0
      %v1255 = vpop.f32.mrf.mxu0
      %v1256 = vadd.f32 %v483, %v1255
      %v1257 = vpop.f32.mrf.mxu0
      %1258 = vmatprep.mubr.bf16.mxu0 0
      %1259 = vmatmul.mubr.bf16.gmra.mxu0 %v873
      %v1260 = vpop.f32.mrf.mxu0
      %v1261 = vadd.f32 %v483, %v1260
      %v1262 = vpop.f32.mrf.mxu0
      %v1263 = vpop.f32.mrf.mxu0
      %v1264 = vadd.f32 %v483, %v1263
      %v1265 = vpop.f32.mrf.mxu0
      %1266 = vmatprep.mubr.bf16.mxu0 0
      %1267 = vmatmul.mubr.bf16.gmra.mxu0 %v876
      %v1268 = vpop.f32.mrf.mxu0
      %v1269 = vadd.f32 %v483, %v1268
      %v1270 = vpop.f32.mrf.mxu0
      %v1271 = vpop.f32.mrf.mxu0
      %v1272 = vadd.f32 %v483, %v1271
      %v1273 = vpop.f32.mrf.mxu0
      %1274 = vmatprep.mubr.bf16.mxu0 0
      %1275 = vmatmul.mubr.bf16.gmra.mxu0 %v879
      %v1276 = vpop.f32.mrf.mxu0
      %v1277 = vadd.f32 %v483, %v1276
      %v1278 = vpop.f32.mrf.mxu0
      %v1279 = vpop.f32.mrf.mxu0
      %v1280 = vadd.f32 %v483, %v1279
      %v1281 = vpop.f32.mrf.mxu0
      %1282 = vmatprep.mubr.bf16.mxu0 0
      %1283 = vmatmul.mubr.bf16.gmra.mxu0 %v882
      %v1284 = vpop.f32.mrf.mxu0
      %v1285 = vadd.f32 %v483, %v1284
      %v1286 = vpop.f32.mrf.mxu0
      %v1287 = vpop.f32.mrf.mxu0
      %v1288 = vadd.f32 %v483, %v1287
      %v1289 = vpop.f32.mrf.mxu0
      %1290 = vmatprep.mubr.bf16.mxu0 0
      %1291 = vmatmul.mubr.bf16.gmra.mxu0 %v885
      %v1292 = vpop.f32.mrf.mxu0
      %v1293 = vadd.f32 %v483, %v1292
      %v1294 = vpop.f32.mrf.mxu0
      %v1295 = vpop.f32.mrf.mxu0
      %v1296 = vadd.f32 %v483, %v1295
      %v1297 = vpop.f32.mrf.mxu0
      %1298 = vmatprep.mubr.bf16.mxu0 0
      %1299 = vmatmul.mubr.bf16.gmra.mxu0 %v888
      %v1300 = vpop.f32.mrf.mxu0
      %v1301 = vadd.f32 %v483, %v1300
      %v1302 = vpop.f32.mrf.mxu0
      %v1303 = vpop.f32.mrf.mxu0
      %v1304 = vadd.f32 %v483, %v1303
      %v1305 = vpop.f32.mrf.mxu0
      %1306 = vmatprep.mubr.bf16.mxu0 0
      %1307 = vmatmul.mubr.bf16.gmra.mxu0 %v891
      %v1308 = vpop.f32.mrf.mxu0
      %v1309 = vadd.f32 %v483, %v1308
      %v1310 = vpop.f32.mrf.mxu0
      %v1311 = vpop.f32.mrf.mxu0
      %v1312 = vadd.f32 %v483, %v1311
      %v1313 = vpop.f32.mrf.mxu0
      %1314 = vmatprep.mubr.bf16.mxu0 0
      %1315 = vmatmul.mubr.bf16.gmra.mxu0 %v894
      %v1316 = vpop.f32.mrf.mxu0
      %v1317 = vadd.f32 %v483, %v1316
      %v1318 = vpop.f32.mrf.mxu0
      %v1319 = vpop.f32.mrf.mxu0
      %v1320 = vadd.f32 %v483, %v1319
      %v1321 = vpop.f32.mrf.mxu0
      %1322 = vmatprep.mubr.bf16.mxu0 0
      %1323 = vmatmul.mubr.bf16.gmra.mxu0 %v897
      %v1324 = vpop.f32.mrf.mxu0
      %v1325 = vadd.f32 %v483, %v1324
      %v1326 = vpop.f32.mrf.mxu0
      %v1327 = vpop.f32.mrf.mxu0
      %v1328 = vadd.f32 %v483, %v1327
      %v1329 = vpop.f32.mrf.mxu0
      %1330 = vmatprep.mubr.bf16.mxu0 0
      %1331 = vmatmul.mubr.bf16.gmra.mxu0 %v900
      %v1332 = vpop.f32.mrf.mxu0
      %v1333 = vadd.f32 %v483, %v1332
      %v1334 = vpop.f32.mrf.mxu0
      %v1335 = vpop.f32.mrf.mxu0
      %v1336 = vadd.f32 %v483, %v1335
      %v1337 = vpop.f32.mrf.mxu0
      %1338 = vmatprep.mubr.bf16.mxu0 0
      %1339 = vmatmul.mubr.bf16.gmra.mxu0 %v903
      %v1340 = vpop.f32.mrf.mxu0
      %v1341 = vadd.f32 %v483, %v1340
      %v1342 = vpop.f32.mrf.mxu0
      %v1343 = vpop.f32.mrf.mxu0
      %v1344 = vadd.f32 %v483, %v1343
      %v1345 = vpop.f32.mrf.mxu0
      %1346 = vmatprep.mubr.bf16.mxu0 0
      %1347 = vmatmul.mubr.bf16.gmra.mxu0 %v906
      %v1348 = vpop.f32.mrf.mxu0
      %v1349 = vadd.f32 %v483, %v1348
      %v1350 = vpop.f32.mrf.mxu0
      %v1351 = vpop.f32.mrf.mxu0
      %v1352 = vadd.f32 %v483, %v1351
      %v1353 = vpop.f32.mrf.mxu0
      %1354 = vmatprep.mubr.bf16.mxu0 0
      %1355 = vmatmul.mubr.bf16.gmra.mxu0 %v909
      %v1356 = vpop.f32.mrf.mxu0
      %v1357 = vadd.f32 %v483, %v1356
      %v1358 = vpop.f32.mrf.mxu0
      %v1359 = vpop.f32.mrf.mxu0
      %v1360 = vadd.f32 %v483, %v1359
      %v1361 = vpop.f32.mrf.mxu0
      %1362 = vmatprep.mubr.bf16.mxu0 0
      %1363 = vmatmul.mubr.bf16.gmra.mxu0 %v912
      %v1364 = vpop.f32.mrf.mxu0
      %v1365 = vadd.f32 %v483, %v1364
      %v1366 = vpop.f32.mrf.mxu0
      %v1367 = vpop.f32.mrf.mxu0
      %v1368 = vadd.f32 %v483, %v1367
      %v1369 = vpop.f32.mrf.mxu0
      %1370 = vmatprep.mubr.bf16.mxu0 0
      %1371 = vmatmul.mubr.bf16.gmra.mxu0 %v915
      %v1372 = vpop.f32.mrf.mxu0
      %v1373 = vadd.f32 %v483, %v1372
      %v1374 = vpop.f32.mrf.mxu0
      %v1375 = vpop.f32.mrf.mxu0
      %v1376 = vadd.f32 %v483, %v1375
      %v1377 = vpop.f32.mrf.mxu0
      %1378 = vmatprep.mubr.bf16.mxu0 0
      %1379 = vmatmul.mubr.bf16.gmra.mxu0 %v918
      %v1380 = vpop.f32.mrf.mxu0
      %v1381 = vadd.f32 %v483, %v1380
      %v1382 = vpop.f32.mrf.mxu0
      %v1383 = vpop.f32.mrf.mxu0
      %v1384 = vadd.f32 %v483, %v1383
      %v1385 = vpop.f32.mrf.mxu0
      %1386 = vmatprep.mubr.bf16.mxu0 0
      %1387 = vmatmul.mubr.bf16.gmra.mxu0 %v921
      %v1388 = vpop.f32.mrf.mxu0
      %v1389 = vadd.f32 %v483, %v1388
      %v1390 = vpop.f32.mrf.mxu0
      %v1391 = vpop.f32.mrf.mxu0
      %v1392 = vadd.f32 %v483, %v1391
      %v1393 = vpop.f32.mrf.mxu0
      %1394 = vdwg.mxu0
      %v1395 = vmax.f32 %v965, 0.0
      %v1396 = vmax.f32 %v968, 0.0
      %v1397 = vmax.f32 %v973, 0.0
      %v1398 = vmax.f32 %v976, 0.0
      %v1399 = vmax.f32 %v981, 0.0
      %v1400 = vmax.f32 %v984, 0.0
      %v1401 = vmax.f32 %v989, 0.0
      %v1402 = vmax.f32 %v992, 0.0
      %v1403 = vmax.f32 %v997, 0.0
      %v1404 = vmax.f32 %v1000, 0.0
      %v1405 = vmax.f32 %v1005, 0.0
      %v1406 = vmax.f32 %v1008, 0.0
      %v1407 = vmax.f32 %v1013, 0.0
      %v1408 = vmax.f32 %v1016, 0.0
      %v1409 = vmax.f32 %v1021, 0.0
      %v1410 = vmax.f32 %v1024, 0.0
      %v1411 = vmax.f32 %v1029, 0.0
      %v1412 = vmax.f32 %v1032, 0.0
      %v1413 = vmax.f32 %v1037, 0.0
      %v1414 = vmax.f32 %v1040, 0.0
      %v1415 = vmax.f32 %v1045, 0.0
      %v1416 = vmax.f32 %v1048, 0.0
      %v1417 = vmax.f32 %v1053, 0.0
      %v1418 = vmax.f32 %v1056, 0.0
      %v1419 = vmax.f32 %v1061, 0.0
      %v1420 = vmax.f32 %v1064, 0.0
      %v1421 = vmax.f32 %v1069, 0.0
      %v1422 = vmax.f32 %v1072, 0.0
      %v1423 = vmax.f32 %v1077, 0.0
      %v1424 = vmax.f32 %v1080, 0.0
      %v1425 = vmax.f32 %v1085, 0.0
      %v1426 = vmax.f32 %v1088, 0.0
      %v1427 = vmax.f32 %v1093, 0.0
      %v1428 = vmax.f32 %v1096, 0.0
      %v1429 = vmax.f32 %v1101, 0.0
      %v1430 = vmax.f32 %v1104, 0.0
      %v1431 = vmax.f32 %v1109, 0.0
      %v1432 = vmax.f32 %v1112, 0.0
      %v1433 = vmax.f32 %v1117, 0.0
      %v1434 = vmax.f32 %v1120, 0.0
      %v1435 = vmax.f32 %v1125, 0.0
      %v1436 = vmax.f32 %v1128, 0.0
      %v1437 = vmax.f32 %v1133, 0.0
      %v1438 = vmax.f32 %v1136, 0.0
      %v1439 = vmax.f32 %v1141, 0.0
      %v1440 = vmax.f32 %v1144, 0.0
      %v1441 = vmax.f32 %v1149, 0.0
      %v1442 = vmax.f32 %v1152, 0.0
      %v1443 = vmax.f32 %v1157, 0.0
      %v1444 = vmax.f32 %v1160, 0.0
      %v1445 = vmax.f32 %v1165, 0.0
      %v1446 = vmax.f32 %v1168, 0.0
      %v1447 = vmax.f32 %v1173, 0.0
      %v1448 = vmax.f32 %v1176, 0.0
      %v1449 = vmax.f32 %v1181, 0.0
      %v1450 = vmax.f32 %v1184, 0.0
      %v1451 = vmax.f32 %v1189, 0.0
      %v1452 = vmax.f32 %v1192, 0.0
      %v1453 = vmax.f32 %v1197, 0.0
      %v1454 = vmax.f32 %v1200, 0.0
      %v1455 = vmax.f32 %v1205, 0.0
      %v1456 = vmax.f32 %v1208, 0.0
      %v1457 = vmax.f32 %v1213, 0.0
      %v1458 = vmax.f32 %v1216, 0.0
      %v1459 = vmax.f32 %v1221, 0.0
      %v1460 = vmax.f32 %v1224, 0.0
      %v1461 = vmax.f32 %v1229, 0.0
      %v1462 = vmax.f32 %v1232, 0.0
      %v1463 = vmax.f32 %v1237, 0.0
      %v1464 = vmax.f32 %v1240, 0.0
      %v1465 = vmax.f32 %v1245, 0.0
      %v1466 = vmax.f32 %v1248, 0.0
      %v1467 = vmax.f32 %v1253, 0.0
      %v1468 = vmax.f32 %v1256, 0.0
      %v1469 = vmax.f32 %v1261, 0.0
      %v1470 = vmax.f32 %v1264, 0.0
      %v1471 = vmax.f32 %v1269, 0.0
      %v1472 = vmax.f32 %v1272, 0.0
      %v1473 = vmax.f32 %v1277, 0.0
      %v1474 = vmax.f32 %v1280, 0.0
      %v1475 = vmax.f32 %v1285, 0.0
      %v1476 = vmax.f32 %v1288, 0.0
      %v1477 = vmax.f32 %v1293, 0.0
      %v1478 = vmax.f32 %v1296, 0.0
      %v1479 = vmax.f32 %v1301, 0.0
      %v1480 = vmax.f32 %v1304, 0.0
      %v1481 = vmax.f32 %v1309, 0.0
      %v1482 = vmax.f32 %v1312, 0.0
      %v1483 = vmax.f32 %v1317, 0.0
      %v1484 = vmax.f32 %v1320, 0.0
      %v1485 = vmax.f32 %v1325, 0.0
      %v1486 = vmax.f32 %v1328, 0.0
      %v1487 = vmax.f32 %v1333, 0.0
      %v1488 = vmax.f32 %v1336, 0.0
      %v1489 = vmax.f32 %v1341, 0.0
      %v1490 = vmax.f32 %v1344, 0.0
      %v1491 = vmax.f32 %v1349, 0.0
      %v1492 = vmax.f32 %v1352, 0.0
      %v1493 = vmax.f32 %v1357, 0.0
      %v1494 = vmax.f32 %v1360, 0.0
      %v1495 = vmax.f32 %v1365, 0.0
      %v1496 = vmax.f32 %v1368, 0.0
      %v1497 = vmax.f32 %v1373, 0.0
      %v1498 = vmax.f32 %v1376, 0.0
      %v1499 = vmax.f32 %v1381, 0.0
      %v1500 = vmax.f32 %v1384, 0.0
      %v1501 = vmax.f32 %v1389, 0.0
      %v1502 = vmax.f32 %v1392, 0.0
      %v1503 = vpack.c.bf16 %v1396, %v1395
      %v1504 = vpack.c.bf16 %v1398, %v1397
      %v1505 = vpack.c.bf16 %v1400, %v1399
      %v1506 = vpack.c.bf16 %v1402, %v1401
      %v1507 = vpack.c.bf16 %v1404, %v1403
      %v1508 = vpack.c.bf16 %v1406, %v1405
      %v1509 = vpack.c.bf16 %v1408, %v1407
      %v1510 = vpack.c.bf16 %v1410, %v1409
      %v1511 = vpack.c.bf16 %v1412, %v1411
      %v1512 = vpack.c.bf16 %v1414, %v1413
      %v1513 = vpack.c.bf16 %v1416, %v1415
      %v1514 = vpack.c.bf16 %v1418, %v1417
      %v1515 = vpack.c.bf16 %v1420, %v1419
      %v1516 = vpack.c.bf16 %v1422, %v1421
      %v1517 = vpack.c.bf16 %v1424, %v1423
      %v1518 = vpack.c.bf16 %v1426, %v1425
      %v1519 = vpack.c.bf16 %v1428, %v1427
      %v1520 = vpack.c.bf16 %v1430, %v1429
      %v1521 = vpack.c.bf16 %v1432, %v1431
      %v1522 = vpack.c.bf16 %v1434, %v1433
      %v1523 = vpack.c.bf16 %v1436, %v1435
      %v1524 = vpack.c.bf16 %v1438, %v1437
      %v1525 = vpack.c.bf16 %v1440, %v1439
      %v1526 = vpack.c.bf16 %v1442, %v1441
      %v1527 = vpack.c.bf16 %v1444, %v1443
      %v1528 = vpack.c.bf16 %v1446, %v1445
      %v1529 = vpack.c.bf16 %v1448, %v1447
      %v1530 = vpack.c.bf16 %v1450, %v1449
      %v1531 = vpack.c.bf16 %v1452, %v1451
      %v1532 = vpack.c.bf16 %v1454, %v1453
      %v1533 = vpack.c.bf16 %v1456, %v1455
      %v1534 = vpack.c.bf16 %v1458, %v1457
      %v1535 = vpack.c.bf16 %v1460, %v1459
      %v1536 = vpack.c.bf16 %v1462, %v1461
      %v1537 = vpack.c.bf16 %v1464, %v1463
      %v1538 = vpack.c.bf16 %v1466, %v1465
      %v1539 = vpack.c.bf16 %v1468, %v1467
      %v1540 = vpack.c.bf16 %v1470, %v1469
      %v1541 = vpack.c.bf16 %v1472, %v1471
      %v1542 = vpack.c.bf16 %v1474, %v1473
      %v1543 = vpack.c.bf16 %v1476, %v1475
      %v1544 = vpack.c.bf16 %v1478, %v1477
      %v1545 = vpack.c.bf16 %v1480, %v1479
      %v1546 = vpack.c.bf16 %v1482, %v1481
      %v1547 = vpack.c.bf16 %v1484, %v1483
      %v1548 = vpack.c.bf16 %v1486, %v1485
      %v1549 = vpack.c.bf16 %v1488, %v1487
      %v1550 = vpack.c.bf16 %v1490, %v1489
      %v1551 = vpack.c.bf16 %v1492, %v1491
      %v1552 = vpack.c.bf16 %v1494, %v1493
      %v1553 = vpack.c.bf16 %v1496, %v1495
      %v1554 = vpack.c.bf16 %v1498, %v1497
      %v1555 = vpack.c.bf16 %v1500, %v1499
      %v1556 = vpack.c.bf16 %v1502, %v1501
      %1563 = vrot.lane.b32.xlu0 %v1509, 32
      %v1564 = vpop.permute.xlu0 %1563
      %1565 = vrot.lane.b32.xlu0 %v1510, 32
      %v1566 = vpop.permute.xlu0 %1565
      %1567 = vrot.lane.b32.xlu0 %v1511, 32
      %v1568 = vpop.permute.xlu0 %1567
      %1569 = vrot.lane.b32.xlu0 %v1512, 32
      %v1570 = vpop.permute.xlu0 %1569
      %1571 = vrot.lane.b32.xlu0 %v1513, 32
      %v1572 = vpop.permute.xlu0 %1571
      %1573 = vrot.lane.b32.xlu0 %v1514, 32
      %v1574 = vpop.permute.xlu0 %1573
      %1581 = vrot.lane.b32.xlu0 %v1515, 64
      %v1582 = vpop.permute.xlu0 %1581
      %1583 = vrot.lane.b32.xlu0 %v1516, 64
      %v1584 = vpop.permute.xlu0 %1583
      %1585 = vrot.lane.b32.xlu0 %v1517, 64
      %v1586 = vpop.permute.xlu0 %1585
      %1587 = vrot.lane.b32.xlu0 %v1518, 64
      %v1588 = vpop.permute.xlu0 %1587
      %1589 = vrot.lane.b32.xlu0 %v1519, 64
      %v1590 = vpop.permute.xlu0 %1589
      %1591 = vrot.lane.b32.xlu0 %v1520, 64
      %v1592 = vpop.permute.xlu0 %1591
      %1599 = vrot.lane.b32.xlu0 %v1521, 96
      %v1600 = vpop.permute.xlu0 %1599
      %1601 = vrot.lane.b32.xlu0 %v1522, 96
      %v1602 = vpop.permute.xlu0 %1601
      %1603 = vrot.lane.b32.xlu0 %v1523, 96
      %v1604 = vpop.permute.xlu0 %1603
      %1605 = vrot.lane.b32.xlu0 %v1524, 96
      %v1606 = vpop.permute.xlu0 %1605
      %1607 = vrot.lane.b32.xlu0 %v1525, 96
      %v1608 = vpop.permute.xlu0 %1607
      %1609 = vrot.lane.b32.xlu0 %v1526, 96
      %v1610 = vpop.permute.xlu0 %1609
      %1617 = vrot.lane.b32.xlu0 %v1533, 32
      %v1618 = vpop.permute.xlu0 %1617
      %1619 = vrot.lane.b32.xlu0 %v1534, 32
      %v1620 = vpop.permute.xlu0 %1619
      %1621 = vrot.lane.b32.xlu0 %v1535, 32
      %v1622 = vpop.permute.xlu0 %1621
      %1623 = vrot.lane.b32.xlu0 %v1536, 32
      %v1624 = vpop.permute.xlu0 %1623
      %1625 = vrot.lane.b32.xlu0 %v1537, 32
      %v1626 = vpop.permute.xlu0 %1625
      %1627 = vrot.lane.b32.xlu0 %v1538, 32
      %v1628 = vpop.permute.xlu0 %1627
      %1635 = vrot.lane.b32.xlu0 %v1539, 64
      %v1636 = vpop.permute.xlu0 %1635
      %1637 = vrot.lane.b32.xlu0 %v1540, 64
      %v1638 = vpop.permute.xlu0 %1637
      %1639 = vrot.lane.b32.xlu0 %v1541, 64
      %v1640 = vpop.permute.xlu0 %1639
      %1641 = vrot.lane.b32.xlu0 %v1542, 64
      %v1642 = vpop.permute.xlu0 %1641
      %1643 = vrot.lane.b32.xlu0 %v1543, 64
      %v1644 = vpop.permute.xlu0 %1643
      %1645 = vrot.lane.b32.xlu0 %v1544, 64
      %v1646 = vpop.permute.xlu0 %1645
      %1653 = vrot.lane.b32.xlu0 %v1545, 96
      %v1654 = vpop.permute.xlu0 %1653
      %1655 = vrot.lane.b32.xlu0 %v1546, 96
      %v1656 = vpop.permute.xlu0 %1655
      %1657 = vrot.lane.b32.xlu0 %v1547, 96
      %v1658 = vpop.permute.xlu0 %1657
      %1659 = vrot.lane.b32.xlu0 %v1548, 96
      %v1660 = vpop.permute.xlu0 %1659
      %1661 = vrot.lane.b32.xlu0 %v1549, 96
      %v1662 = vpop.permute.xlu0 %1661
      %1663 = vrot.lane.b32.xlu0 %v1550, 96
      %v1664 = vpop.permute.xlu0 %1663
      %vm1665 = vcmask 261120
      %v1668 = vsel %vm1665, %v1503, %v1564
      %v1671 = vsel %vm1665, %v1504, %v1566
      %v1674 = vsel %vm1665, %v1505, %v1568
      %v1677 = vsel %vm1665, %v1506, %v1570
      %v1680 = vsel %vm1665, %v1507, %v1572
      %v1683 = vsel %vm1665, %v1508, %v1574
      %vm1684 = vcmask 523264
      %v1686 = vsel %vm1684, %v1668, %v1582
      %v1688 = vsel %vm1684, %v1671, %v1584
      %v1690 = vsel %vm1684, %v1674, %v1586
      %v1692 = vsel %vm1684, %v1677, %v1588
      %v1694 = vsel %vm1684, %v1680, %v1590
      %v1696 = vsel %vm1684, %v1683, %v1592
      %vm1697 = vcmask 785408
      %v1699 = vsel %vm1697, %v1686, %v1600
      %v1702 = vsel %vm1697, %v1688, %v1602
      %v1705 = vsel %vm1697, %v1690, %v1604
      %v1708 = vsel %vm1697, %v1692, %v1606
      %v1711 = vsel %vm1697, %v1694, %v1608
      %v1714 = vsel %vm1697, %v1696, %v1610
      %v1718 = vsel %vm1665, %v1527, %v1618
      %v1721 = vsel %vm1665, %v1528, %v1620
      %v1724 = vsel %vm1665, %v1529, %v1622
      %v1727 = vsel %vm1665, %v1530, %v1624
      %v1730 = vsel %vm1665, %v1531, %v1626
      %v1733 = vsel %vm1665, %v1532, %v1628
      %v1735 = vsel %vm1684, %v1718, %v1636
      %v1737 = vsel %vm1684, %v1721, %v1638
      %v1739 = vsel %vm1684, %v1724, %v1640
      %v1741 = vsel %vm1684, %v1727, %v1642
      %v1743 = vsel %vm1684, %v1730, %v1644
      %v1745 = vsel %vm1684, %v1733, %v1646
      %v1747 = vsel %vm1697, %v1735, %v1654
      %v1750 = vsel %vm1697, %v1737, %v1656
      %v1753 = vsel %vm1697, %v1739, %v1658
      %v1756 = vsel %vm1697, %v1741, %v1660
      %v1759 = vsel %vm1697, %v1743, %v1662
      %v1762 = vsel %vm1697, %v1745, %v1664
      %v1764 = vld [vmem:[%s3] sm:$0xf]
      %v1765 = vld [vmem:[%s3 + $0x4] sm:$0xf]
      %v1766 = vld [vmem:[%s3 + $0x8] sm:$0xf]
      %v1767 = vld [vmem:[%s3 + $0xc] sm:$0xf]
      %v1768 = vld [vmem:[%s3 + $0x10] sm:$0xf]
      %v1769 = vld [vmem:[%s3 + $0x14] sm:$0xf]
      %v1770 = vld [vmem:[%s3 + $0x18] sm:$0xf]
      %v1771 = vld [vmem:[%s3 + $0x1c] sm:$0xf]
      %v1772 = vld [vmem:[%s3 + $0x20] sm:$0xf]
      %v1773 = vld [vmem:[%s3 + $0x24] sm:$0xf]
      %v1774 = vld [vmem:[%s3 + $0x28] sm:$0xf]
      %v1775 = vld [vmem:[%s3 + $0x2c] sm:$0xf]
      %v1776 = vld [vmem:[%s3 + $0x30] sm:$0xf]
      %v1777 = vld [vmem:[%s3 + $0x34] sm:$0xf]
      %v1778 = vld [vmem:[%s3 + $0x38] sm:$0xf]
      %v1779 = vld [vmem:[%s3 + $0x3c] sm:$0xf]
      %v1780 = vld [vmem:[%s3 + $0x40] sm:$0xf]
      %v1781 = vld [vmem:[%s3 + $0x44] sm:$0xf]
      %v1782 = vld [vmem:[%s3 + $0x48] sm:$0xf]
      %v1783 = vld [vmem:[%s3 + $0x4c] sm:$0xf]
      %v1784 = vld [vmem:[%s3 + $0x50] sm:$0xf]
      %v1785 = vld [vmem:[%s3 + $0x54] sm:$0xf]
      %v1786 = vld [vmem:[%s3 + $0x58] sm:$0xf]
      %v1787 = vld [vmem:[%s3 + $0x5c] sm:$0xf]
      %v1788 = vld [vmem:[%s3 + $0x60] sm:$0xf]
      %v1789 = vld [vmem:[%s3 + $0x64] sm:$0xf]
      %v1790 = vld [vmem:[%s3 + $0x68] sm:$0xf]
      %v1791 = vld [vmem:[%s3 + $0x6c] sm:$0xf]
      %v1792 = vld [vmem:[%s3 + $0x70] sm:$0xf]
      %v1793 = vld [vmem:[%s3 + $0x74] sm:$0xf]
      %v1794 = vld [vmem:[%s3 + $0x78] sm:$0xf]
      %v1795 = vld [vmem:[%s3 + $0x7c] sm:$0xf]
      %v1796 = vld [vmem:[%s3 + $0x80] sm:$0xf]
      %v1797 = vld [vmem:[%s3 + $0x84] sm:$0xf]
      %v1798 = vld [vmem:[%s3 + $0x88] sm:$0xf]
      %v1799 = vld [vmem:[%s3 + $0x8c] sm:$0xf]
      %v1800 = vld [vmem:[%s4] sm:$0x1]
      %v1802 = vlaneseq
      %v1803 = vshrl.u32 %v1802, 7
      %v1804 = vsub.s32 0, %v1803
      %v1805 = vrot.slane %v1800, %v1804
      %v1843 = vunpack.c.l.b16 %v1764
      %v1844 = vunpack.c.l.b16 %v1765
      %v1845 = vunpack.c.l.b16 %v1766
      %v1846 = vunpack.c.l.b16 %v1767
      %v1847 = vunpack.c.l.b16 %v1768
      %v1848 = vunpack.c.l.b16 %v1769
      %v1849 = vunpack.c.l.b16 %v1770
      %v1850 = vunpack.c.l.b16 %v1771
      %v1851 = vunpack.c.l.b16 %v1772
      %v1852 = vunpack.c.l.b16 %v1773
      %v1853 = vunpack.c.l.b16 %v1774
      %v1854 = vunpack.c.l.b16 %v1775
      %v1855 = vunpack.c.l.b16 %v1776
      %v1856 = vunpack.c.l.b16 %v1777
      %v1857 = vunpack.c.l.b16 %v1778
      %v1858 = vunpack.c.l.b16 %v1779
      %v1859 = vunpack.c.l.b16 %v1780
      %v1860 = vunpack.c.l.b16 %v1781
      %v1861 = vunpack.c.l.b16 %v1782
      %v1862 = vunpack.c.l.b16 %v1783
      %v1863 = vunpack.c.l.b16 %v1784
      %v1864 = vunpack.c.l.b16 %v1785
      %v1865 = vunpack.c.l.b16 %v1786
      %v1866 = vunpack.c.l.b16 %v1787
      %v1867 = vunpack.c.l.b16 %v1788
      %v1868 = vunpack.c.l.b16 %v1789
      %v1869 = vunpack.c.l.b16 %v1790
      %v1870 = vunpack.c.l.b16 %v1791
      %v1871 = vunpack.c.l.b16 %v1792
      %v1872 = vunpack.c.l.b16 %v1793
      %v1873 = vunpack.c.l.b16 %v1794
      %v1874 = vunpack.c.l.b16 %v1795
      %v1875 = vunpack.c.l.b16 %v1796
      %v1876 = vunpack.c.l.b16 %v1797
      %v1877 = vunpack.c.l.b16 %v1798
      %v1878 = vunpack.c.l.b16 %v1799
      %v1879 = vpack.c.b16 %v1844, %v1843
      %v1880 = vpack.c.b16 %v1846, %v1845
      %v1881 = vpack.c.b16 %v1848, %v1847
      %v1882 = vpack.c.b16 %v1850, %v1849
      %v1883 = vpack.c.b16 %v1852, %v1851
      %v1884 = vpack.c.b16 %v1854, %v1853
      %v1885 = vpack.c.b16 %v1856, %v1855
      %v1886 = vpack.c.b16 %v1858, %v1857
      %v1887 = vpack.c.b16 %v1860, %v1859
      %v1888 = vpack.c.b16 %v1862, %v1861
      %v1889 = vpack.c.b16 %v1864, %v1863
      %v1890 = vpack.c.b16 %v1866, %v1865
      %v1891 = vpack.c.b16 %v1868, %v1867
      %v1892 = vpack.c.b16 %v1870, %v1869
      %v1893 = vpack.c.b16 %v1872, %v1871
      %v1894 = vpack.c.b16 %v1874, %v1873
      %v1895 = vpack.c.b16 %v1876, %v1875
      %v1896 = vpack.c.b16 %v1878, %v1877
      %v1916 = vsel %vm1665, %v1551, 0
      %v1919 = vsel %vm1665, %v1552, 0
      %v1922 = vsel %vm1665, %v1553, 0
      %v1925 = vsel %vm1665, %v1554, 0
      %v1928 = vsel %vm1665, %v1555, 0
      %v1931 = vsel %vm1665, %v1556, 0
      %1933 = vmatprep.subr.bf16.mxu0 0
      %1934 = vmatpush1.bf16.msra.mxu0 %v1886
      %1935 = vmatprep.subr.bf16.mxu0 0
      %1936 = vmatpush1.bf16.msra.mxu0 %v1885
      %1937 = vmatprep.subr.bf16.mxu0 0
      %1938 = vmatpush1.bf16.msra.mxu0 %v1884
      %1939 = vmatprep.subr.bf16.mxu0 0
      %1940 = vmatpush1.bf16.msra.mxu0 %v1883
      %1941 = vmatprep.subr.bf16.mxu0 0
      %1942 = vmatpush1.bf16.msra.mxu0 %v1882
      %1943 = vmatprep.subr.bf16.mxu0 0
      %1944 = vmatpush1.bf16.msra.mxu0 %v1881
      %1945 = vmatprep.subr.bf16.mxu0 0
      %1946 = vmatpush1.bf16.msra.mxu0 %v1880
      %1947 = vmatprep.subr.bf16.mxu0 0
      %1948 = vmatpush1.bf16.msra.mxu0 %v1879
      %1949 = vmatprep.subr.bf16.mxu0 0
      %1950 = vmatpush2.bf16.msra.mxu0 %v1894
      %1951 = vmatprep.subr.bf16.mxu0 0
      %1952 = vmatpush2.bf16.msra.mxu0 %v1893
      %1953 = vmatprep.subr.bf16.mxu0 0
      %1954 = vmatpush2.bf16.msra.mxu0 %v1892
      %1955 = vmatprep.subr.bf16.mxu0 0
      %1956 = vmatpush2.bf16.msra.mxu0 %v1891
      %1957 = vmatprep.subr.bf16.mxu0 0
      %1958 = vmatpush2.bf16.msra.mxu0 %v1890
      %1959 = vmatprep.subr.bf16.mxu0 0
      %1960 = vmatpush2.bf16.msra.mxu0 %v1889
      %1961 = vmatprep.subr.bf16.mxu0 0
      %1962 = vmatpush2.bf16.msra.mxu0 %v1888
      %1963 = vmatprep.subr.bf16.mxu0 0
      %1964 = vmatpush2.bf16.msra.mxu0 %v1887
      %1965 = vmatprep.mubr.bf16.mxu0 %v1747
      %1966 = vmatmul.mubr.bf16.gmra.mxu0 %v1699
      %v1967 = vpop.f32.mrf.mxu0
      %v1968 = vadd.f32 %v1805, %v1967
      %v1969 = vpop.f32.mrf.mxu0
      %v1970 = vpop.f32.mrf.mxu0
      %v1971 = vadd.f32 %v1805, %v1970
      %v1972 = vpop.f32.mrf.mxu0
      %1973 = vmatprep.mubr.bf16.mxu0 %v1750
      %1974 = vmatmul.mubr.bf16.gmra.mxu0 %v1702
      %v1975 = vpop.f32.mrf.mxu0
      %v1976 = vadd.f32 %v1805, %v1975
      %v1977 = vpop.f32.mrf.mxu0
      %v1978 = vpop.f32.mrf.mxu0
      %v1979 = vadd.f32 %v1805, %v1978
      %v1980 = vpop.f32.mrf.mxu0
      %1981 = vmatprep.mubr.bf16.mxu0 %v1753
      %1982 = vmatmul.mubr.bf16.gmra.mxu0 %v1705
      %v1983 = vpop.f32.mrf.mxu0
      %v1984 = vadd.f32 %v1805, %v1983
      %v1985 = vpop.f32.mrf.mxu0
      %v1986 = vpop.f32.mrf.mxu0
      %v1987 = vadd.f32 %v1805, %v1986
      %v1988 = vpop.f32.mrf.mxu0
      %1989 = vmatprep.mubr.bf16.mxu0 %v1756
      %1990 = vmatmul.mubr.bf16.gmra.mxu0 %v1708
      %v1991 = vpop.f32.mrf.mxu0
      %v1992 = vadd.f32 %v1805, %v1991
      %v1993 = vpop.f32.mrf.mxu0
      %v1994 = vpop.f32.mrf.mxu0
      %v1995 = vadd.f32 %v1805, %v1994
      %v1996 = vpop.f32.mrf.mxu0
      %1997 = vmatprep.mubr.bf16.mxu0 %v1759
      %1998 = vmatmul.mubr.bf16.gmra.mxu0 %v1711
      %v1999 = vpop.f32.mrf.mxu0
      %v2000 = vadd.f32 %v1805, %v1999
      %v2001 = vpop.f32.mrf.mxu0
      %v2002 = vpop.f32.mrf.mxu0
      %v2003 = vadd.f32 %v1805, %v2002
      %v2004 = vpop.f32.mrf.mxu0
      %2005 = vmatprep.mubr.bf16.mxu0 %v1762
      %2006 = vmatmul.mubr.bf16.gmra.mxu0 %v1714
      %v2007 = vpop.f32.mrf.mxu0
      %v2008 = vadd.f32 %v1805, %v2007
      %v2009 = vpop.f32.mrf.mxu0
      %v2010 = vpop.f32.mrf.mxu0
      %v2011 = vadd.f32 %v1805, %v2010
      %v2012 = vpop.f32.mrf.mxu0
      %2013 = vdwg.mxu0
      %2014 = vmatprep.subr.bf16.mxu0 0
      %2015 = vmatpush1.bf16.msra.mxu0 0
      %2016 = vmatprep.subr.bf16.mxu0 0
      %2017 = vmatpush1.bf16.msra.mxu0 0
      %2018 = vmatprep.subr.bf16.mxu0 0
      %2019 = vmatpush1.bf16.msra.mxu0 0
      %2020 = vmatprep.subr.bf16.mxu0 0
      %2021 = vmatpush1.bf16.msra.mxu0 0
      %2022 = vmatprep.subr.bf16.mxu0 0
      %2023 = vmatpush1.bf16.msra.mxu0 0
      %2024 = vmatprep.subr.bf16.mxu0 0
      %2025 = vmatpush1.bf16.msra.mxu0 0
      %2026 = vmatprep.subr.bf16.mxu0 0
      %2027 = vmatpush1.bf16.msra.mxu0 %v1896
      %2028 = vmatprep.subr.bf16.mxu0 0
      %2029 = vmatpush1.bf16.msra.mxu0 %v1895
      %2030 = vmatprep.subr.bf16.mxu0 0
      %2031 = vmatpush2.bf16.msra.mxu0 0
      %2032 = vmatprep.subr.bf16.mxu0 0
      %2033 = vmatpush2.bf16.msra.mxu0 0
      %2034 = vmatprep.subr.bf16.mxu0 0
      %2035 = vmatpush2.bf16.msra.mxu0 0
      %2036 = vmatprep.subr.bf16.mxu0 0
      %2037 = vmatpush2.bf16.msra.mxu0 0
      %2038 = vmatprep.subr.bf16.mxu0 0
      %2039 = vmatpush2.bf16.msra.mxu0 0
      %2040 = vmatprep.subr.bf16.mxu0 0
      %2041 = vmatpush2.bf16.msra.mxu0 0
      %2042 = vmatprep.subr.bf16.mxu0 0
      %2043 = vmatpush2.bf16.msra.mxu0 0
      %2044 = vmatprep.subr.bf16.mxu0 0
      %2045 = vmatpush2.bf16.msra.mxu0 0
      %2046 = vmatprep.mubr.bf16.mxu0 0
      %2047 = vmatmul.mubr.bf16.gmra.mxu0 %v1916
      %v2048 = vpop.f32.mrf.mxu0
      %v2049 = vadd.f32 %v1968, %v2048
      %v2050 = vpop.f32.mrf.mxu0
      %v2051 = vpop.f32.mrf.mxu0
      %v2052 = vadd.f32 %v1971, %v2051
      %v2053 = vpop.f32.mrf.mxu0
      %2054 = vmatprep.mubr.bf16.mxu0 0
      %2055 = vmatmul.mubr.bf16.gmra.mxu0 %v1919
      %v2056 = vpop.f32.mrf.mxu0
      %v2057 = vadd.f32 %v1976, %v2056
      %v2058 = vpop.f32.mrf.mxu0
      %v2059 = vpop.f32.mrf.mxu0
      %v2060 = vadd.f32 %v1979, %v2059
      %v2061 = vpop.f32.mrf.mxu0
      %2062 = vmatprep.mubr.bf16.mxu0 0
      %2063 = vmatmul.mubr.bf16.gmra.mxu0 %v1922
      %v2064 = vpop.f32.mrf.mxu0
      %v2065 = vadd.f32 %v1984, %v2064
      %v2066 = vpop.f32.mrf.mxu0
      %v2067 = vpop.f32.mrf.mxu0
      %v2068 = vadd.f32 %v1987, %v2067
      %v2069 = vpop.f32.mrf.mxu0
      %2070 = vmatprep.mubr.bf16.mxu0 0
      %2071 = vmatmul.mubr.bf16.gmra.mxu0 %v1925
      %v2072 = vpop.f32.mrf.mxu0
      %v2073 = vadd.f32 %v1992, %v2072
      %v2074 = vpop.f32.mrf.mxu0
      %v2075 = vpop.f32.mrf.mxu0
      %v2076 = vadd.f32 %v1995, %v2075
      %v2077 = vpop.f32.mrf.mxu0
      %2078 = vmatprep.mubr.bf16.mxu0 0
      %2079 = vmatmul.mubr.bf16.gmra.mxu0 %v1928
      %v2080 = vpop.f32.mrf.mxu0
      %v2081 = vadd.f32 %v2000, %v2080
      %v2082 = vpop.f32.mrf.mxu0
      %v2083 = vpop.f32.mrf.mxu0
      %v2084 = vadd.f32 %v2003, %v2083
      %v2085 = vpop.f32.mrf.mxu0
      %2086 = vmatprep.mubr.bf16.mxu0 0
      %2087 = vmatmul.mubr.bf16.gmra.mxu0 %v1931
      %v2088 = vpop.f32.mrf.mxu0
      %v2089 = vadd.f32 %v2008, %v2088
      %v2090 = vpop.f32.mrf.mxu0
      %v2091 = vpop.f32.mrf.mxu0
      %v2092 = vadd.f32 %v2011, %v2091
      %v2093 = vpop.f32.mrf.mxu0
      %2094 = vdwg.mxu0
      %v2095 = vmax.f32 %v2049, 0.0
      %v2096 = vmax.f32 %v2052, 0.0
      %v2097 = vmax.f32 %v2057, 0.0
      %v2098 = vmax.f32 %v2060, 0.0
      %v2099 = vmax.f32 %v2065, 0.0
      %v2100 = vmax.f32 %v2068, 0.0
      %v2101 = vmax.f32 %v2073, 0.0
      %v2102 = vmax.f32 %v2076, 0.0
      %v2103 = vmax.f32 %v2081, 0.0
      %v2104 = vmax.f32 %v2084, 0.0
      %v2105 = vmax.f32 %v2089, 0.0
      %v2106 = vmax.f32 %v2092, 0.0
      %v2107 = vpack.c.bf16 %v2096, %v2095
      %v2108 = vpack.c.bf16 %v2098, %v2097
      %v2109 = vpack.c.bf16 %v2100, %v2099
      %v2110 = vpack.c.bf16 %v2102, %v2101
      %v2111 = vpack.c.bf16 %v2104, %v2103
      %v2112 = vpack.c.bf16 %v2106, %v2105
      %2115 = vrot.lane.b32.xlu0 %v2109, 32
      %v2116 = vpop.permute.xlu0 %2115
      %2117 = vrot.lane.b32.xlu0 %v2110, 32
      %v2118 = vpop.permute.xlu0 %2117
      %2121 = vrot.lane.b32.xlu0 %v2111, 64
      %v2122 = vpop.permute.xlu0 %2121
      %2123 = vrot.lane.b32.xlu0 %v2112, 64
      %v2124 = vpop.permute.xlu0 %2123
      %v2127 = vsel %vm1665, %v2107, %v2116
      %v2130 = vsel %vm1665, %v2108, %v2118
      %v2132 = vsel %vm1684, %v2127, %v2122
      %v2134 = vsel %vm1684, %v2130, %v2124
      %v2135 = vld [vmem:[%s5] sm:$0xf]
      %v2136 = vld [vmem:[%s5 + $0x4] sm:$0xf]
      %v2137 = vld [vmem:[%s5 + $0x8] sm:$0xf]
      %v2138 = vld [vmem:[%s5 + $0xc] sm:$0xf]
      %v2139 = vld [vmem:[%s5 + $0x10] sm:$0xf]
      %v2140 = vld [vmem:[%s5 + $0x14] sm:$0xf]
      %v2141 = vld [vmem:[%s5 + $0x18] sm:$0xf]
      %v2142 = vld [vmem:[%s5 + $0x1c] sm:$0xf]
      %v2143 = vld [vmem:[%s5 + $0x20] sm:$0xf]
      %v2144 = vld [vmem:[%s5 + $0x24] sm:$0xf]
      %v2145 = vld [vmem:[%s5 + $0x28] sm:$0xf]
      %v2146 = vld [vmem:[%s5 + $0x2c] sm:$0xf]
      %v2147 = vld [vmem:[%s6] sm:$0x1]
      %v2149 = vlaneseq
      %v2150 = vshrl.u32 %v2149, 7
      %v2151 = vsub.s32 0, %v2150
      %v2152 = vrot.slane %v2147, %v2151
      %v2166 = vunpack.c.l.b16 %v2135
      %v2167 = vunpack.c.l.b16 %v2136
      %v2168 = vunpack.c.l.b16 %v2137
      %v2169 = vunpack.c.l.b16 %v2138
      %v2170 = vunpack.c.l.b16 %v2139
      %v2171 = vunpack.c.l.b16 %v2140
      %v2172 = vunpack.c.l.b16 %v2141
      %v2173 = vunpack.c.l.b16 %v2142
      %v2174 = vunpack.c.l.b16 %v2143
      %v2175 = vunpack.c.l.b16 %v2144
      %v2176 = vunpack.c.l.b16 %v2145
      %v2177 = vunpack.c.l.b16 %v2146
      %v2178 = vpack.c.b16 %v2167, %v2166
      %v2179 = vpack.c.b16 %v2169, %v2168
      %v2180 = vpack.c.b16 %v2171, %v2170
      %v2181 = vpack.c.b16 %v2173, %v2172
      %v2182 = vpack.c.b16 %v2175, %v2174
      %v2183 = vpack.c.b16 %v2177, %v2176
      %v2190 = vsel %vm1697, %v2132, 0
      %v2192 = vsel %vm1697, %v2134, 0
      %2194 = vmatprep.subr.bf16.mxu0 0
      %2195 = vmatpush1.bf16.msra.mxu0 0
      %2196 = vmatprep.subr.bf16.mxu0 0
      %2197 = vmatpush1.bf16.msra.mxu0 0
      %2198 = vmatprep.subr.bf16.mxu0 0
      %2199 = vmatpush1.bf16.msra.mxu0 %v2183
      %2200 = vmatprep.subr.bf16.mxu0 0
      %2201 = vmatpush1.bf16.msra.mxu0 %v2182
      %2202 = vmatprep.subr.bf16.mxu0 0
      %2203 = vmatpush1.bf16.msra.mxu0 %v2181
      %2204 = vmatprep.subr.bf16.mxu0 0
      %2205 = vmatpush1.bf16.msra.mxu0 %v2180
      %2206 = vmatprep.subr.bf16.mxu0 0
      %2207 = vmatpush1.bf16.msra.mxu0 %v2179
      %2208 = vmatprep.subr.bf16.mxu0 0
      %2209 = vmatpush1.bf16.msra.mxu0 %v2178
      %2210 = vmatprep.subr.bf16.mxu0 0
      %2211 = vmatpush2.bf16.msra.mxu0 0
      %2212 = vmatprep.subr.bf16.mxu0 0
      %2213 = vmatpush2.bf16.msra.mxu0 0
      %2214 = vmatprep.subr.bf16.mxu0 0
      %2215 = vmatpush2.bf16.msra.mxu0 0
      %2216 = vmatprep.subr.bf16.mxu0 0
      %2217 = vmatpush2.bf16.msra.mxu0 0
      %2218 = vmatprep.subr.bf16.mxu0 0
      %2219 = vmatpush2.bf16.msra.mxu0 0
      %2220 = vmatprep.subr.bf16.mxu0 0
      %2221 = vmatpush2.bf16.msra.mxu0 0
      %2222 = vmatprep.subr.bf16.mxu0 0
      %2223 = vmatpush2.bf16.msra.mxu0 0
      %2224 = vmatprep.subr.bf16.mxu0 0
      %2225 = vmatpush2.bf16.msra.mxu0 0
      %2226 = vmatprep.mubr.bf16.mxu0 0
      %2227 = vmatmul.mubr.bf16.gmra.mxu0 %v2190
      %v2228 = vpop.f32.mrf.mxu0
      %v2229 = vadd.f32 %v2152, %v2228
      %v2230 = vpop.f32.mrf.mxu0
      %v2231 = vpop.f32.mrf.mxu0
      %v2232 = vadd.f32 %v2152, %v2231
      %v2233 = vpop.f32.mrf.mxu0
      %2234 = vmatprep.mubr.bf16.mxu0 0
      %2235 = vmatmul.mubr.bf16.gmra.mxu0 %v2192
      %v2236 = vpop.f32.mrf.mxu0
      %v2237 = vadd.f32 %v2152, %v2236
      %v2238 = vpop.f32.mrf.mxu0
      %v2239 = vpop.f32.mrf.mxu0
      %v2240 = vadd.f32 %v2152, %v2239
      %v2241 = vpop.f32.mrf.mxu0
      %2242 = vdwg.mxu0
      %v2243 = vld [vmem:[%s355] sm:$0xff]
      %v2244 = vld [vmem:[%s355 + $0x8] sm:$0xff]
      %v2245 = vld [vmem:[%s355 + $0x10] sm:$0xff]
      %v2246 = vld [vmem:[%s355 + $0x18] sm:$0xff]
      %v2247 = vadd.f32 %v2229, %v2243
      %v2248 = vadd.f32 %v2232, %v2244
      %v2249 = vadd.f32 %v2237, %v2245
      %v2250 = vadd.f32 %v2240, %v2246
      %2251 = vst.msk [vmem:[%s365] sm:$0xff] %vm1665, %v2247
      %2252 = vst.msk [vmem:[%s365 + $0x8] sm:$0xff] %vm1665, %v2248
      %2253 = vst.msk [vmem:[%s365 + $0x10] sm:$0xff] %vm1665, %v2249
      %2254 = vst.msk [vmem:[%s365 + $0x18] sm:$0xff] %vm1665, %v2250
      %s2255 = smul.u32 4, %s24
      %p2256 = scmp.lt.s32.totalorder %s23, 1
      %s2257 = scalar_select %p2256, %s23, 1
      %p2258 = scmp.lt.s32.totalorder %s2255, 3
      %s2259 = scalar_select %p2258, %s2255, 3
      %s2260 = smul.addr %s2257, 4
      %s2261 = sadd.s32 %s2259, %s2260
      %s2262 = smul.addr %s2261, 8
      %s2263 = scalar_lea.vmem %s8, %s2262
      // Predicated region
      $region53: #{conv2d_subsampling_pallas.1} parent=51 // pred_check
        %p2264 = pneg %p231
      $region54: #{conv2d_subsampling_pallas.1} parent=51 // pred_check_branch
        %2266 = sbr.rel (%p2264) target = $region56
      $region55: #{conv2d_subsampling_pallas.1} parent=51 // pred_region
        %s2267 = smul.u32 4, %s24
      $region56: #{conv2d_subsampling_pallas.1} parent=51 // pred_fallthru
        _
    $region52: #{conv2d_subsampling_pallas.1} parent=5 // pred_fallthru
      _
    %p2268 = scmp.le.s32.totalorder 2, %s14
    // Predicated region
    $region57: #{conv2d_subsampling_pallas.1} parent=5 // pred_check
      %p2269 = pneg %p2268
    $region58: #{conv2d_subsampling_pallas.1} parent=5 // pred_check_branch
      %2271 = sbr.rel (%p2269) target = $region60
    $region59: #{conv2d_subsampling_pallas.1} parent=5 // pred_region
      %s2272 = ssub.s32 %s14, 2
      // Predicated region
      $region61: #{conv2d_subsampling_pallas.1} parent=59 // pred_check
        %p2273 = pneg %p237
      $region62: #{conv2d_subsampling_pallas.1} parent=59 // pred_check_branch
        %2275 = sbr.rel (%p2273) target = $region64
      $region63: #{conv2d_subsampling_pallas.1} parent=59 // pred_region
        %s2276 = smul.u32 4, %s26
        %p2277 = scmp.lt.s32.totalorder %s25, 1
        %s2278 = scalar_select %p2277, %s25, 1
        %p2279 = scmp.lt.s32.totalorder %s2276, 3
        %s2280 = scalar_select %p2279, %s2276, 3
        %s2281 = smul.addr %s2278, 4
        %s2282 = sadd.s32 %s2280, %s2281
        %s2283 = smul.addr %s2282, 8
        %s2284 = scalar_lea.vmem %s8, %s2283
      $region64: #{conv2d_subsampling_pallas.1} parent=59 // pred_fallthru
        _
    $region60: #{conv2d_subsampling_pallas.1} parent=5 // pred_fallthru
      _
  $region6: #{conv2d_subsampling_pallas.1} parent=0 // loop_footer
    %s18 = sadd.s32 1, %s14
  $region7: #{conv2d_subsampling_pallas.1} parent=0 // loop_footer_branch
    %13 = sbr.rel target = $region3
  $region8: #{conv2d_subsampling_pallas.1} parent=0 // loop_exit
    _

</llo_original>
